<compile_context>
chip_gen: v7x
topology: tpu7x:2x2x1
jax: 0.10.0
libtpu: 0.0.40
codegen_flags: <defaults>
</compile_context>

<pallas_src>
import functools

import jax
import jax.numpy as jnp
from jax import lax
from jax.experimental import pallas as pl
from jax.experimental.pallas import tpu as pltpu

P_DROP = 0.1


def _hash_u32(x):
    """SplitMix32-style avalanching finalizer (stateless, counter-based RNG)."""
    x = x ^ (x >> 16)
    x = x * jnp.uint32(0x7FEB352D)
    x = x ^ (x >> 15)
    x = x * jnp.uint32(0x846CA68B)
    x = x ^ (x >> 16)
    return x


def _dropout_matmul_kernel(seed_ref, a_ref, v_ref, o_ref, *, p, heads_per_block):
    """a_ref: (G, S, S) attn probs; v_ref: (G, S, D) values; o_ref: (S, G*D)."""
    G = heads_per_block
    _, S, _ = a_ref.shape
    D = v_ref.shape[-1]

    blk = pl.program_id(0)
    base_head = (blk * G).astype(jnp.uint32)
    seed = seed_ref[0].astype(jnp.uint32)

    # One independent hashed uint32 per (head, row, col) dropout decision.
    g_idx = lax.broadcasted_iota(jnp.int32, (G, S, S), 0).astype(jnp.uint32)
    r_idx = lax.broadcasted_iota(jnp.int32, (G, S, S), 1).astype(jnp.uint32)
    c_idx = lax.broadcasted_iota(jnp.int32, (G, S, S), 2).astype(jnp.uint32)
    ctr = ((base_head + g_idx) * jnp.uint32(S) + r_idx) * jnp.uint32(S) + c_idx
    bits = _hash_u32(ctr ^ (seed * jnp.uint32(0x9E3779B9)))

    # Keep an element with probability (1 - p): uniform u32 >= floor(p * 2^32).
    threshold = jnp.uint32(min(int(p * (2 ** 32)), 2 ** 32 - 1))
    keep = bits >= threshold

    # Drop without scaling here; the uniform 1/(1-p) scale is applied to the
    # much smaller (S, G*D) matmul result instead. bf16 operands, f32 accum.
    a = jnp.where(keep, a_ref[...], 0.0).astype(jnp.bfloat16)
    v = v_ref[...].astype(jnp.bfloat16)

    scale = jnp.float32(1.0 / (1.0 - p))
    outs = [
        jnp.dot(a[g], v[g], preferred_element_type=jnp.float32) * scale
        for g in range(G)
    ]
    # Concatenate heads along the last axis -> lane-dense (S, G*D) store.
    o_ref[...] = jnp.concatenate(outs, axis=-1).astype(o_ref.dtype)


def _pick_heads_per_block(num_heads, seq, head_dim, itemsize,
                          vmem_budget_bytes=8 << 20):
    """Largest divisor of num_heads whose double-buffered block fits the budget."""
    best = 1
    for g in range(1, num_heads + 1):
        if num_heads % g:
            continue
        block_bytes = (g * seq * seq + 2 * g * seq * head_dim) * itemsize
        if 2 * block_bytes <= vmem_budget_bytes:  # BlockSpec double-buffers
            best = g
    return best


def dropout_matmul(attn, value, seed: int, p: float = P_DROP,
                   heads_per_block=None):
    """matmul(dropout(attn, p), value) with torch training-mode dropout semantics
    (zero with prob p, survivors scaled by 1/(1-p))."""
    B, H, S, S2 = attn.shape
    assert S == S2, "attention matrix must be square in the last two dims"
    Bv, Hv, Sv, D = value.shape
    assert (B, H, S) == (Bv, Hv, Sv)
    NH = B * H

    if heads_per_block is None:
        heads_per_block = _pick_heads_per_block(NH, S, D, attn.dtype.itemsize)
    G = heads_per_block
    assert NH % G == 0
    NB = NH // G

    a = attn.reshape(NH, S, S)
    v = value.reshape(NH, S, D)
    seed_arr = jnp.array([seed], dtype=jnp.int32)

    kernel = functools.partial(_dropout_matmul_kernel, p=p, heads_per_block=G)

    # TODO(synk): for very large S (e.g. >=2048 on v7x's 64 MiB VMEM), tile the
    # query-row dimension of A/O instead of keeping a full (S, S) block.
    out = pl.pallas_call(
        kernel,
        out_shape=jax.ShapeDtypeStruct((NB, S, G * D), attn.dtype),
        grid_spec=pltpu.PrefetchScalarGridSpec(
            num_scalar_prefetch=1,
            grid=(NB,),
            in_specs=[
                pl.BlockSpec((G, S, S), lambda i, seed: (i, 0, 0)),
                pl.BlockSpec((G, S, D), lambda i, seed: (i, 0, 0)),
            ],
            out_specs=pl.BlockSpec((None, S, G * D), lambda i, seed: (i, 0, 0)),
        ),
        compiler_params=pltpu.CompilerParams(
            # Stateless counter-based RNG -> iterations are order-independent,
            # so the head axis can be sharded across v7x's two TensorCores.
            dimension_semantics=("parallel",),
        ),
    )(seed_arr, a, v)

    # (NB, S, G*D) -> (B, H, S, D): pure layout plumbing.
    out = out.reshape(NB, S, G, D).transpose(0, 2, 1, 3).reshape(B, H, S, D)
    return out


if __name__ == "__main__":
    # Small shapes consistent with the module [1, 4, 384, 384] @ [1, 4, 384, 64],
    # scaled down to seq=128, head_dim=64.
    B, H, S, D = 1, 4, 128, 64

    key = jax.random.PRNGKey(0)
    k1, k2 = jax.random.split(key)
    x221 = jax.random.normal(k1, (B, H, S, S), dtype=jnp.float32)  # dropout input
    x210 = jax.random.normal(k2, (B, H, S, D), dtype=jnp.float32)  # matmul rhs

    out = dropout_matmul(x221, x210, seed=0, p=P_DROP)
    out = jax.block_until_ready(out)

    assert out.shape == (B, H, S, D), out.shape
    assert out.dtype == jnp.float32, out.dtype
    assert bool(jnp.all(jnp.isfinite(out)))

    # Sanity: E[dropout(x)] == x, so out should be close to x221 @ x210.
    ref = jnp.einsum("bhij,bhjd->bhid", x221, x210)
    rel = jnp.linalg.norm(out - ref) / jnp.linalg.norm(ref)
    assert float(rel) < 0.5, f"dropout-matmul deviates too much: rel={float(rel)}"

    print("KERNEL_OK")
</pallas_src>

<mosaic_0001>
module attributes {stable_mosaic.version = 11 : i64} {
  func.func @_dropout_matmul_kernel(%arg0: i32, %arg1: memref<1xi32, #tpu.memory_space<smem>>, %arg2: memref<4x128x128xf32, #tpu.memory_space<vmem>>, %arg3: memref<4x128x64xf32, #tpu.memory_space<vmem>>, %arg4: memref<1x128x256xf32, #tpu.memory_space<vmem>>) attributes {dimension_semantics = [#tpu.dimension_semantics<parallel>], iteration_bounds = array<i64: 1>, scalar_prefetch = 1 : i64, scratch_operands = 0 : i64, tpu.core_type = #tpu.core_type<tc>, window_params = [{transform_indices = @transform_0, window_bounds = array<i64: 4, 128, 128>}, {transform_indices = @transform_1, window_bounds = array<i64: 4, 128, 64>}, {transform_indices = @transform_2, window_bounds = array<i64: 1, 128, 256>}]} {
    %c4_i32 = arith.constant 4 : i32
    %0 = arith.muli %arg0, %c4_i32 : i32
    %c0 = arith.constant 0 : index
    %1 = memref.load %arg1[%c0] : memref<1xi32, #tpu.memory_space<smem>>
    %2 = tpu.iota {dimensions = array<i32: 0>} : vector<4x128x128xi32>
    %3 = tpu.iota {dimensions = array<i32: 1>} : vector<4x128x128xi32>
    %4 = tpu.iota {dimensions = array<i32: 2>} : vector<4x128x128xi32>
    %5 = vector.broadcast %0 : i32 to vector<4x128x128xi32>
    %6 = arith.addi %5, %2 : vector<4x128x128xi32>
    %c128_i32 = arith.constant 128 : i32
    %7 = vector.broadcast %c128_i32 : i32 to vector<4x128x128xi32>
    %8 = arith.muli %6, %7 : vector<4x128x128xi32>
    %9 = arith.addi %8, %3 : vector<4x128x128xi32>
    %c128_i32_0 = arith.constant 128 : i32
    %10 = vector.broadcast %c128_i32_0 : i32 to vector<4x128x128xi32>
    %11 = arith.muli %9, %10 : vector<4x128x128xi32>
    %12 = arith.addi %11, %4 : vector<4x128x128xi32>
    %c-1640531527_i32 = arith.constant -1640531527 : i32
    %13 = arith.muli %1, %c-1640531527_i32 : i32
    %14 = vector.broadcast %13 : i32 to vector<4x128x128xi32>
    %15 = arith.xori %12, %14 : vector<4x128x128xi32>
    %c16_i32 = arith.constant 16 : i32
    %16 = vector.broadcast %c16_i32 : i32 to vector<4x128x128xi32>
    %17 = arith.shrui %15, %16 : vector<4x128x128xi32>
    %18 = arith.xori %15, %17 : vector<4x128x128xi32>
    %c2146121005_i32 = arith.constant 2146121005 : i32
    %19 = vector.broadcast %c2146121005_i32 : i32 to vector<4x128x128xi32>
    %20 = arith.muli %18, %19 : vector<4x128x128xi32>
    %c15_i32 = arith.constant 15 : i32
    %21 = vector.broadcast %c15_i32 : i32 to vector<4x128x128xi32>
    %22 = arith.shrui %20, %21 : vector<4x128x128xi32>
    %23 = arith.xori %20, %22 : vector<4x128x128xi32>
    %c-2073254261_i32 = arith.constant -2073254261 : i32
    %24 = vector.broadcast %c-2073254261_i32 : i32 to vector<4x128x128xi32>
    %25 = arith.muli %23, %24 : vector<4x128x128xi32>
    %c16_i32_1 = arith.constant 16 : i32
    %26 = vector.broadcast %c16_i32_1 : i32 to vector<4x128x128xi32>
    %27 = arith.shrui %25, %26 : vector<4x128x128xi32>
    %28 = arith.xori %25, %27 : vector<4x128x128xi32>
    %c429496729_i32 = arith.constant 429496729 : i32
    %29 = vector.broadcast %c429496729_i32 : i32 to vector<4x128x128xi32>
    %30 = arith.cmpi uge, %28, %29 : vector<4x128x128xi32>
    %c0_2 = arith.constant 0 : index
    %c0_3 = arith.constant 0 : index
    %c0_4 = arith.constant 0 : index
    %31 = vector.load %arg2[%c0_2, %c0_3, %c0_4] : memref<4x128x128xf32, #tpu.memory_space<vmem>>, vector<4x128x128xf32>
    %cst = arith.constant 0.000000e+00 : f32
    %32 = vector.broadcast %cst : f32 to vector<4x128x128xf32>
    %33 = arith.select %30, %31, %32 : vector<4x128x128xi1>, vector<4x128x128xf32>
    %34 = arith.truncf %33 : vector<4x128x128xf32> to vector<4x128x128xbf16>
    %c0_5 = arith.constant 0 : index
    %c0_6 = arith.constant 0 : index
    %c0_7 = arith.constant 0 : index
    %35 = vector.load %arg3[%c0_5, %c0_6, %c0_7] : memref<4x128x64xf32, #tpu.memory_space<vmem>>, vector<4x128x64xf32>
    %36 = arith.truncf %35 : vector<4x128x64xf32> to vector<4x128x64xbf16>
    %37 = vector.extract_strided_slice %34 {offsets = [0, 0, 0], sizes = [1, 128, 128], strides = [1, 1, 1]} : vector<4x128x128xbf16> to vector<1x128x128xbf16>
    %38 = vector.shape_cast %37 : vector<1x128x128xbf16> to vector<128x128xbf16>
    %39 = vector.extract_strided_slice %36 {offsets = [0, 0, 0], sizes = [1, 128, 64], strides = [1, 1, 1]} : vector<4x128x64xbf16> to vector<1x128x64xbf16>
    %40 = vector.shape_cast %39 : vector<1x128x64xbf16> to vector<128x64xbf16>
    %cst_8 = arith.constant dense<0.000000e+00> : vector<128x64xf32>
    %41 = tpu.matmul %38, %40, %cst_8 {dimension_numbers = #tpu.dot_dimension_numbers<[1], [0], [0], [1], [0, 0, 1, 1], [], []>} : vector<128x128xbf16>, vector<128x64xbf16>, vector<128x64xf32> -> vector<128x64xf32>
    %cst_9 = arith.constant 1.11111116 : f32
    %42 = vector.broadcast %cst_9 : f32 to vector<128x64xf32>
    %43 = arith.mulf %41, %42 : vector<128x64xf32>
    %44 = vector.extract_strided_slice %34 {offsets = [1, 0, 0], sizes = [1, 128, 128], strides = [1, 1, 1]} : vector<4x128x128xbf16> to vector<1x128x128xbf16>
    %45 = vector.shape_cast %44 : vector<1x128x128xbf16> to vector<128x128xbf16>
    %46 = vector.extract_strided_slice %36 {offsets = [1, 0, 0], sizes = [1, 128, 64], strides = [1, 1, 1]} : vector<4x128x64xbf16> to vector<1x128x64xbf16>
    %47 = vector.shape_cast %46 : vector<1x128x64xbf16> to vector<128x64xbf16>
    %cst_10 = arith.constant dense<0.000000e+00> : vector<128x64xf32>
    %48 = tpu.matmul %45, %47, %cst_10 {dimension_numbers = #tpu.dot_dimension_numbers<[1], [0], [0], [1], [0, 0, 1, 1], [], []>} : vector<128x128xbf16>, vector<128x64xbf16>, vector<128x64xf32> -> vector<128x64xf32>
    %cst_11 = arith.constant 1.11111116 : f32
    %49 = vector.broadcast %cst_11 : f32 to vector<128x64xf32>
    %50 = arith.mulf %48, %49 : vector<128x64xf32>
    %51 = vector.extract_strided_slice %34 {offsets = [2, 0, 0], sizes = [1, 128, 128], strides = [1, 1, 1]} : vector<4x128x128xbf16> to vector<1x128x128xbf16>
    %52 = vector.shape_cast %51 : vector<1x128x128xbf16> to vector<128x128xbf16>
    %53 = vector.extract_strided_slice %36 {offsets = [2, 0, 0], sizes = [1, 128, 64], strides = [1, 1, 1]} : vector<4x128x64xbf16> to vector<1x128x64xbf16>
    %54 = vector.shape_cast %53 : vector<1x128x64xbf16> to vector<128x64xbf16>
    %cst_12 = arith.constant dense<0.000000e+00> : vector<128x64xf32>
    %55 = tpu.matmul %52, %54, %cst_12 {dimension_numbers = #tpu.dot_dimension_numbers<[1], [0], [0], [1], [0, 0, 1, 1], [], []>} : vector<128x128xbf16>, vector<128x64xbf16>, vector<128x64xf32> -> vector<128x64xf32>
    %cst_13 = arith.constant 1.11111116 : f32
    %56 = vector.broadcast %cst_13 : f32 to vector<128x64xf32>
    %57 = arith.mulf %55, %56 : vector<128x64xf32>
    %58 = vector.extract_strided_slice %34 {offsets = [3, 0, 0], sizes = [1, 128, 128], strides = [1, 1, 1]} : vector<4x128x128xbf16> to vector<1x128x128xbf16>
    %59 = vector.shape_cast %58 : vector<1x128x128xbf16> to vector<128x128xbf16>
    %60 = vector.extract_strided_slice %36 {offsets = [3, 0, 0], sizes = [1, 128, 64], strides = [1, 1, 1]} : vector<4x128x64xbf16> to vector<1x128x64xbf16>
    %61 = vector.shape_cast %60 : vector<1x128x64xbf16> to vector<128x64xbf16>
    %cst_14 = arith.constant dense<0.000000e+00> : vector<128x64xf32>
    %62 = tpu.matmul %59, %61, %cst_14 {dimension_numbers = #tpu.dot_dimension_numbers<[1], [0], [0], [1], [0, 0, 1, 1], [], []>} : vector<128x128xbf16>, vector<128x64xbf16>, vector<128x64xf32> -> vector<128x64xf32>
    %cst_15 = arith.constant 1.11111116 : f32
    %63 = vector.broadcast %cst_15 : f32 to vector<128x64xf32>
    %64 = arith.mulf %62, %63 : vector<128x64xf32>
    %65 = tpu.concatenate %43, %50, %57, %64 in 1 : vector<128x64xf32>, vector<128x64xf32>, vector<128x64xf32>, vector<128x64xf32> -> vector<128x256xf32>
    %c0_16 = arith.constant 0 : index
    %c0_17 = arith.constant 0 : index
    %c0_18 = arith.constant 0 : index
    %66 = vector.load %arg4[%c0_16, %c0_17, %c0_18] : memref<1x128x256xf32, #tpu.memory_space<vmem>>, vector<1x128x256xf32>
    %67 = vector.shape_cast %66 : vector<1x128x256xf32> to vector<128x256xf32>
    %68 = vector.shape_cast %65 : vector<128x256xf32> to vector<1x128x256xf32>
    tpu.vector_store %arg4[%c0_16, %c0_17, %c0_18], %68 {strides = array<i32>} : memref<1x128x256xf32, #tpu.memory_space<vmem>>, vector<1x128x256xf32>,
    return
  }
  func.func @transform_0(%arg0: i32, %arg1: memref<1xi32, #tpu.memory_space<smem>>) -> (i32, i32, i32) {
    %c0_i32 = arith.constant 0 : i32
    %c0_i32_0 = arith.constant 0 : i32
    %c0_i32_1 = arith.constant 0 : i32
    return %arg0, %c0_i32, %c0_i32_0 : i32, i32, i32
  }
  func.func @transform_1(%arg0: i32, %arg1: memref<1xi32, #tpu.memory_space<smem>>) -> (i32, i32, i32) {
    %c0_i32 = arith.constant 0 : i32
    %c0_i32_0 = arith.constant 0 : i32
    %c0_i32_1 = arith.constant 0 : i32
    return %arg0, %c0_i32, %c0_i32_0 : i32, i32, i32
  }
  func.func @transform_2(%arg0: i32, %arg1: memref<1xi32, #tpu.memory_space<smem>>) -> (i32, i32, i32) {
    %c0_i32 = arith.constant 0 : i32
    %c0_i32_0 = arith.constant 0 : i32
    %c0_i32_1 = arith.constant 0 : i32
    return %arg0, %c0_i32, %c0_i32_0 : i32, i32, i32
  }
}

</mosaic_0001>

<llo_original>
// kernel: tpu_custom_call.1
$region0: #{tpu_custom_call.1}
  #allocation0 [shape = 'u32[]', space=smem, size = 0x4, offset = 0x4, fixed_abs, tag = 'smem constant byte address 0x4 - core index']
  #allocation1 [shape = 'u32[144,128]{1,0:T(1,128)}', space=vmem, size = 0x12000, scoped, tag = 'internal scratch']
  #allocation2 [shape = 's32[1]{0}', space=sflag, size = 0x4, scoped, tag = 'scoped memory for tpu_custom_call.1']
  #allocation3 [shape = 's32[1]{0:T(128)S(6)}', space=smem, size = 0x200, scoped, tag = 'prefetched SMEM operand 0']
  %s0 = inlined_call_operand.<no memory space> [shape: s32[1], index: 0, kind: input, shape index: {}]
  %s1 = inlined_call_operand.vmem [shape: f32[4,128,128], index: 1, kind: input, shape index: {}]
  %s2 = inlined_call_operand.vmem [shape: f32[4,128,64], index: 2, kind: input, shape index: {}]
  %s3 = inlined_call_operand.hbm [shape: f32[1,128,256], index: 3, kind: output, shape index: {}]
  %s4 = sld [smem:[#allocation0]]
  $region18: #{tpu_custom_call.1} parent=0
    _
  %s6 = ssub.s32 1, %s4
  %s7 = scalar_select 0, %s6, %s4
  %8 = sst [smem:[#allocation3]] %s0
  $region1: #{tpu_custom_call.1} parent=0
    #allocation4 [shape = 'u8[131072]{0}', space=vmem, size = 0x20000, scoped, tag = 'output window, operand 0, single buffered']
    #allocation5 [shape = 's32[1]{0}', space=sflag, size = 0x4, scoped, tag = 'scoped memory for tpu_custom_call.1']
    %9 = vsyncpa [#allocation5], 0
    // Predicated region
    $region2: #{tpu_custom_call.1} parent=1 // pred_check
      _
    $region3: #{tpu_custom_call.1} parent=1 // pred_check_branch
      %11 = sbr.rel (0) target = $region5
    $region4: #{tpu_custom_call.1} parent=1 // pred_region
      _
    $region5: #{tpu_custom_call.1} parent=1 // pred_fallthru
      _
    // Predicated region
    $region6: #{tpu_custom_call.1} parent=1 // pred_check
      _
    $region7: #{tpu_custom_call.1} parent=1 // pred_check_branch
      %13 = sbr.rel (0) target = $region9
    $region8: #{tpu_custom_call.1} parent=1 // pred_region
      _
    $region9: #{tpu_custom_call.1} parent=1 // pred_fallthru
      _
    %s15 = smul.u32 0, 4
    %s16 = sld [smem:[#allocation3]]
    %v17 = vlaneseq
    %v18 = vshrl.u32 %v17, 7
    %v19 = vadd.s32 %v18, 8
    %v20 = vadd.s32 %v18, 16
    %v21 = vadd.s32 %v18, 24
    %v22 = vadd.s32 %v18, 32
    %v23 = vadd.s32 %v18, 40
    %v24 = vadd.s32 %v18, 48
    %v25 = vadd.s32 %v18, 56
    %v26 = vadd.s32 %v18, 64
    %v27 = vadd.s32 %v18, 72
    %v28 = vadd.s32 %v18, 80
    %v29 = vadd.s32 %v18, 88
    %v30 = vadd.s32 %v18, 96
    %v31 = vadd.s32 %v18, 104
    %v32 = vadd.s32 %v18, 112
    %v33 = vadd.s32 %v18, 120
    %v34 = vlaneseq
    %v35 = vand.u32 %v34, 127
    %v36 = vstv %s15
    %v37 = vadd.s32 %v36, 1
    %v38 = vadd.s32 %v36, 2
    %v39 = vadd.s32 %v36, 3
    %v40 = vmul.u32 %v36, 128
    %v41 = vmul.u32 %v37, 128
    %v42 = vmul.u32 %v38, 128
    %v43 = vmul.u32 %v39, 128
    %v44 = vadd.s32 %v40, %v18
    %v45 = vadd.s32 %v40, %v19
    %v46 = vadd.s32 %v40, %v20
    %v47 = vadd.s32 %v40, %v21
    %v48 = vadd.s32 %v40, %v22
    %v49 = vadd.s32 %v40, %v23
    %v50 = vadd.s32 %v40, %v24
    %v51 = vadd.s32 %v40, %v25
    %v52 = vadd.s32 %v40, %v26
    %v53 = vadd.s32 %v40, %v27
    %v54 = vadd.s32 %v40, %v28
    %v55 = vadd.s32 %v40, %v29
    %v56 = vadd.s32 %v40, %v30
    %v57 = vadd.s32 %v40, %v31
    %v58 = vadd.s32 %v40, %v32
    %v59 = vadd.s32 %v40, %v33
    %v60 = vadd.s32 %v41, %v18
    %v61 = vadd.s32 %v41, %v19
    %v62 = vadd.s32 %v41, %v20
    %v63 = vadd.s32 %v41, %v21
    %v64 = vadd.s32 %v41, %v22
    %v65 = vadd.s32 %v41, %v23
    %v66 = vadd.s32 %v41, %v24
    %v67 = vadd.s32 %v41, %v25
    %v68 = vadd.s32 %v41, %v26
    %v69 = vadd.s32 %v41, %v27
    %v70 = vadd.s32 %v41, %v28
    %v71 = vadd.s32 %v41, %v29
    %v72 = vadd.s32 %v41, %v30
    %v73 = vadd.s32 %v41, %v31
    %v74 = vadd.s32 %v41, %v32
    %v75 = vadd.s32 %v41, %v33
    %v76 = vadd.s32 %v42, %v18
    %v77 = vadd.s32 %v42, %v19
    %v78 = vadd.s32 %v42, %v20
    %v79 = vadd.s32 %v42, %v21
    %v80 = vadd.s32 %v42, %v22
    %v81 = vadd.s32 %v42, %v23
    %v82 = vadd.s32 %v42, %v24
    %v83 = vadd.s32 %v42, %v25
    %v84 = vadd.s32 %v42, %v26
    %v85 = vadd.s32 %v42, %v27
    %v86 = vadd.s32 %v42, %v28
    %v87 = vadd.s32 %v42, %v29
    %v88 = vadd.s32 %v42, %v30
    %v89 = vadd.s32 %v42, %v31
    %v90 = vadd.s32 %v42, %v32
    %v91 = vadd.s32 %v42, %v33
    %v92 = vadd.s32 %v43, %v18
    %v93 = vadd.s32 %v43, %v19
    %v94 = vadd.s32 %v43, %v20
    %v95 = vadd.s32 %v43, %v21
    %v96 = vadd.s32 %v43, %v22
    %v97 = vadd.s32 %v43, %v23
    %v98 = vadd.s32 %v43, %v24
    %v99 = vadd.s32 %v43, %v25
    %v100 = vadd.s32 %v43, %v26
    %v101 = vadd.s32 %v43, %v27
    %v102 = vadd.s32 %v43, %v28
    %v103 = vadd.s32 %v43, %v29
    %v104 = vadd.s32 %v43, %v30
    %v105 = vadd.s32 %v43, %v31
    %v106 = vadd.s32 %v43, %v32
    %v107 = vadd.s32 %v43, %v33
    %v108 = vmul.u32 %v44, 128
    %v109 = vmul.u32 %v45, 128
    %v110 = vmul.u32 %v46, 128
    %v111 = vmul.u32 %v47, 128
    %v112 = vmul.u32 %v48, 128
    %v113 = vmul.u32 %v49, 128
    %v114 = vmul.u32 %v50, 128
    %v115 = vmul.u32 %v51, 128
    %v116 = vmul.u32 %v52, 128
    %v117 = vmul.u32 %v53, 128
    %v118 = vmul.u32 %v54, 128
    %v119 = vmul.u32 %v55, 128
    %v120 = vmul.u32 %v56, 128
    %v121 = vmul.u32 %v57, 128
    %v122 = vmul.u32 %v58, 128
    %v123 = vmul.u32 %v59, 128
    %v124 = vmul.u32 %v60, 128
    %v125 = vmul.u32 %v61, 128
    %v126 = vmul.u32 %v62, 128
    %v127 = vmul.u32 %v63, 128
    %v128 = vmul.u32 %v64, 128
    %v129 = vmul.u32 %v65, 128
    %v130 = vmul.u32 %v66, 128
    %v131 = vmul.u32 %v67, 128
    %v132 = vmul.u32 %v68, 128
    %v133 = vmul.u32 %v69, 128
    %v134 = vmul.u32 %v70, 128
    %v135 = vmul.u32 %v71, 128
    %v136 = vmul.u32 %v72, 128
    %v137 = vmul.u32 %v73, 128
    %v138 = vmul.u32 %v74, 128
    %v139 = vmul.u32 %v75, 128
    %v140 = vmul.u32 %v76, 128
    %v141 = vmul.u32 %v77, 128
    %v142 = vmul.u32 %v78, 128
    %v143 = vmul.u32 %v79, 128
    %v144 = vmul.u32 %v80, 128
    %v145 = vmul.u32 %v81, 128
    %v146 = vmul.u32 %v82, 128
    %v147 = vmul.u32 %v83, 128
    %v148 = vmul.u32 %v84, 128
    %v149 = vmul.u32 %v85, 128
    %v150 = vmul.u32 %v86, 128
    %v151 = vmul.u32 %v87, 128
    %v152 = vmul.u32 %v88, 128
    %v153 = vmul.u32 %v89, 128
    %v154 = vmul.u32 %v90, 128
    %v155 = vmul.u32 %v91, 128
    %v156 = vmul.u32 %v92, 128
    %v157 = vmul.u32 %v93, 128
    %v158 = vmul.u32 %v94, 128
    %v159 = vmul.u32 %v95, 128
    %v160 = vmul.u32 %v96, 128
    %v161 = vmul.u32 %v97, 128
    %v162 = vmul.u32 %v98, 128
    %v163 = vmul.u32 %v99, 128
    %v164 = vmul.u32 %v100, 128
    %v165 = vmul.u32 %v101, 128
    %v166 = vmul.u32 %v102, 128
    %v167 = vmul.u32 %v103, 128
    %v168 = vmul.u32 %v104, 128
    %v169 = vmul.u32 %v105, 128
    %v170 = vmul.u32 %v106, 128
    %v171 = vmul.u32 %v107, 128
    %v172 = vadd.s32 %v108, %v35
    %v173 = vadd.s32 %v109, %v35
    %v174 = vadd.s32 %v110, %v35
    %v175 = vadd.s32 %v111, %v35
    %v176 = vadd.s32 %v112, %v35
    %v177 = vadd.s32 %v113, %v35
    %v178 = vadd.s32 %v114, %v35
    %v179 = vadd.s32 %v115, %v35
    %v180 = vadd.s32 %v116, %v35
    %v181 = vadd.s32 %v117, %v35
    %v182 = vadd.s32 %v118, %v35
    %v183 = vadd.s32 %v119, %v35
    %v184 = vadd.s32 %v120, %v35
    %v185 = vadd.s32 %v121, %v35
    %v186 = vadd.s32 %v122, %v35
    %v187 = vadd.s32 %v123, %v35
    %v188 = vadd.s32 %v124, %v35
    %v189 = vadd.s32 %v125, %v35
    %v190 = vadd.s32 %v126, %v35
    %v191 = vadd.s32 %v127, %v35
    %v192 = vadd.s32 %v128, %v35
    %v193 = vadd.s32 %v129, %v35
    %v194 = vadd.s32 %v130, %v35
    %v195 = vadd.s32 %v131, %v35
    %v196 = vadd.s32 %v132, %v35
    %v197 = vadd.s32 %v133, %v35
    %v198 = vadd.s32 %v134, %v35
    %v199 = vadd.s32 %v135, %v35
    %v200 = vadd.s32 %v136, %v35
    %v201 = vadd.s32 %v137, %v35
    %v202 = vadd.s32 %v138, %v35
    %v203 = vadd.s32 %v139, %v35
    %v204 = vadd.s32 %v140, %v35
    %v205 = vadd.s32 %v141, %v35
    %v206 = vadd.s32 %v142, %v35
    %v207 = vadd.s32 %v143, %v35
    %v208 = vadd.s32 %v144, %v35
    %v209 = vadd.s32 %v145, %v35
    %v210 = vadd.s32 %v146, %v35
    %v211 = vadd.s32 %v147, %v35
    %v212 = vadd.s32 %v148, %v35
    %v213 = vadd.s32 %v149, %v35
    %v214 = vadd.s32 %v150, %v35
    %v215 = vadd.s32 %v151, %v35
    %v216 = vadd.s32 %v152, %v35
    %v217 = vadd.s32 %v153, %v35
    %v218 = vadd.s32 %v154, %v35
    %v219 = vadd.s32 %v155, %v35
    %v220 = vadd.s32 %v156, %v35
    %v221 = vadd.s32 %v157, %v35
    %v222 = vadd.s32 %v158, %v35
    %v223 = vadd.s32 %v159, %v35
    %v224 = vadd.s32 %v160, %v35
    %v225 = vadd.s32 %v161, %v35
    %v226 = vadd.s32 %v162, %v35
    %v227 = vadd.s32 %v163, %v35
    %v228 = vadd.s32 %v164, %v35
    %v229 = vadd.s32 %v165, %v35
    %v230 = vadd.s32 %v166, %v35
    %v231 = vadd.s32 %v167, %v35
    %v232 = vadd.s32 %v168, %v35
    %v233 = vadd.s32 %v169, %v35
    %v234 = vadd.s32 %v170, %v35
    %v235 = vadd.s32 %v171, %v35
    %s236 = smul.u32 %s16, 2654435769
    %v237 = vstv %s236
    %v238 = vxor.u32 %v172, %v237
    %v239 = vxor.u32 %v173, %v237
    %v240 = vxor.u32 %v174, %v237
    %v241 = vxor.u32 %v175, %v237
    %v242 = vxor.u32 %v176, %v237
    %v243 = vxor.u32 %v177, %v237
    %v244 = vxor.u32 %v178, %v237
    %v245 = vxor.u32 %v179, %v237
    %v246 = vxor.u32 %v180, %v237
    %v247 = vxor.u32 %v181, %v237
    %v248 = vxor.u32 %v182, %v237
    %v249 = vxor.u32 %v183, %v237
    %v250 = vxor.u32 %v184, %v237
    %v251 = vxor.u32 %v185, %v237
    %v252 = vxor.u32 %v186, %v237
    %v253 = vxor.u32 %v187, %v237
    %v254 = vxor.u32 %v188, %v237
    %v255 = vxor.u32 %v189, %v237
    %v256 = vxor.u32 %v190, %v237
    %v257 = vxor.u32 %v191, %v237
    %v258 = vxor.u32 %v192, %v237
    %v259 = vxor.u32 %v193, %v237
    %v260 = vxor.u32 %v194, %v237
    %v261 = vxor.u32 %v195, %v237
    %v262 = vxor.u32 %v196, %v237
    %v263 = vxor.u32 %v197, %v237
    %v264 = vxor.u32 %v198, %v237
    %v265 = vxor.u32 %v199, %v237
    %v266 = vxor.u32 %v200, %v237
    %v267 = vxor.u32 %v201, %v237
    %v268 = vxor.u32 %v202, %v237
    %v269 = vxor.u32 %v203, %v237
    %v270 = vxor.u32 %v204, %v237
    %v271 = vxor.u32 %v205, %v237
    %v272 = vxor.u32 %v206, %v237
    %v273 = vxor.u32 %v207, %v237
    %v274 = vxor.u32 %v208, %v237
    %v275 = vxor.u32 %v209, %v237
    %v276 = vxor.u32 %v210, %v237
    %v277 = vxor.u32 %v211, %v237
    %v278 = vxor.u32 %v212, %v237
    %v279 = vxor.u32 %v213, %v237
    %v280 = vxor.u32 %v214, %v237
    %v281 = vxor.u32 %v215, %v237
    %v282 = vxor.u32 %v216, %v237
    %v283 = vxor.u32 %v217, %v237
    %v284 = vxor.u32 %v218, %v237
    %v285 = vxor.u32 %v219, %v237
    %v286 = vxor.u32 %v220, %v237
    %v287 = vxor.u32 %v221, %v237
    %v288 = vxor.u32 %v222, %v237
    %v289 = vxor.u32 %v223, %v237
    %v290 = vxor.u32 %v224, %v237
    %v291 = vxor.u32 %v225, %v237
    %v292 = vxor.u32 %v226, %v237
    %v293 = vxor.u32 %v227, %v237
    %v294 = vxor.u32 %v228, %v237
    %v295 = vxor.u32 %v229, %v237
    %v296 = vxor.u32 %v230, %v237
    %v297 = vxor.u32 %v231, %v237
    %v298 = vxor.u32 %v232, %v237
    %v299 = vxor.u32 %v233, %v237
    %v300 = vxor.u32 %v234, %v237
    %v301 = vxor.u32 %v235, %v237
    %v302 = vshrl.u32 %v238, 16
    %v303 = vshrl.u32 %v239, 16
    %v304 = vshrl.u32 %v240, 16
    %v305 = vshrl.u32 %v241, 16
    %v306 = vshrl.u32 %v242, 16
    %v307 = vshrl.u32 %v243, 16
    %v308 = vshrl.u32 %v244, 16
    %v309 = vshrl.u32 %v245, 16
    %v310 = vshrl.u32 %v246, 16
    %v311 = vshrl.u32 %v247, 16
    %v312 = vshrl.u32 %v248, 16
    %v313 = vshrl.u32 %v249, 16
    %v314 = vshrl.u32 %v250, 16
    %v315 = vshrl.u32 %v251, 16
    %v316 = vshrl.u32 %v252, 16
    %v317 = vshrl.u32 %v253, 16
    %v318 = vshrl.u32 %v254, 16
    %v319 = vshrl.u32 %v255, 16
    %v320 = vshrl.u32 %v256, 16
    %v321 = vshrl.u32 %v257, 16
    %v322 = vshrl.u32 %v258, 16
    %v323 = vshrl.u32 %v259, 16
    %v324 = vshrl.u32 %v260, 16
    %v325 = vshrl.u32 %v261, 16
    %v326 = vshrl.u32 %v262, 16
    %v327 = vshrl.u32 %v263, 16
    %v328 = vshrl.u32 %v264, 16
    %v329 = vshrl.u32 %v265, 16
    %v330 = vshrl.u32 %v266, 16
    %v331 = vshrl.u32 %v267, 16
    %v332 = vshrl.u32 %v268, 16
    %v333 = vshrl.u32 %v269, 16
    %v334 = vshrl.u32 %v270, 16
    %v335 = vshrl.u32 %v271, 16
    %v336 = vshrl.u32 %v272, 16
    %v337 = vshrl.u32 %v273, 16
    %v338 = vshrl.u32 %v274, 16
    %v339 = vshrl.u32 %v275, 16
    %v340 = vshrl.u32 %v276, 16
    %v341 = vshrl.u32 %v277, 16
    %v342 = vshrl.u32 %v278, 16
    %v343 = vshrl.u32 %v279, 16
    %v344 = vshrl.u32 %v280, 16
    %v345 = vshrl.u32 %v281, 16
    %v346 = vshrl.u32 %v282, 16
    %v347 = vshrl.u32 %v283, 16
    %v348 = vshrl.u32 %v284, 16
    %v349 = vshrl.u32 %v285, 16
    %v350 = vshrl.u32 %v286, 16
    %v351 = vshrl.u32 %v287, 16
    %v352 = vshrl.u32 %v288, 16
    %v353 = vshrl.u32 %v289, 16
    %v354 = vshrl.u32 %v290, 16
    %v355 = vshrl.u32 %v291, 16
    %v356 = vshrl.u32 %v292, 16
    %v357 = vshrl.u32 %v293, 16
    %v358 = vshrl.u32 %v294, 16
    %v359 = vshrl.u32 %v295, 16
    %v360 = vshrl.u32 %v296, 16
    %v361 = vshrl.u32 %v297, 16
    %v362 = vshrl.u32 %v298, 16
    %v363 = vshrl.u32 %v299, 16
    %v364 = vshrl.u32 %v300, 16
    %v365 = vshrl.u32 %v301, 16
    %v366 = vxor.u32 %v238, %v302
    %v367 = vxor.u32 %v239, %v303
    %v368 = vxor.u32 %v240, %v304
    %v369 = vxor.u32 %v241, %v305
    %v370 = vxor.u32 %v242, %v306
    %v371 = vxor.u32 %v243, %v307
    %v372 = vxor.u32 %v244, %v308
    %v373 = vxor.u32 %v245, %v309
    %v374 = vxor.u32 %v246, %v310
    %v375 = vxor.u32 %v247, %v311
    %v376 = vxor.u32 %v248, %v312
    %v377 = vxor.u32 %v249, %v313
    %v378 = vxor.u32 %v250, %v314
    %v379 = vxor.u32 %v251, %v315
    %v380 = vxor.u32 %v252, %v316
    %v381 = vxor.u32 %v253, %v317
    %v382 = vxor.u32 %v254, %v318
    %v383 = vxor.u32 %v255, %v319
    %v384 = vxor.u32 %v256, %v320
    %v385 = vxor.u32 %v257, %v321
    %v386 = vxor.u32 %v258, %v322
    %v387 = vxor.u32 %v259, %v323
    %v388 = vxor.u32 %v260, %v324
    %v389 = vxor.u32 %v261, %v325
    %v390 = vxor.u32 %v262, %v326
    %v391 = vxor.u32 %v263, %v327
    %v392 = vxor.u32 %v264, %v328
    %v393 = vxor.u32 %v265, %v329
    %v394 = vxor.u32 %v266, %v330
    %v395 = vxor.u32 %v267, %v331
    %v396 = vxor.u32 %v268, %v332
    %v397 = vxor.u32 %v269, %v333
    %v398 = vxor.u32 %v270, %v334
    %v399 = vxor.u32 %v271, %v335
    %v400 = vxor.u32 %v272, %v336
    %v401 = vxor.u32 %v273, %v337
    %v402 = vxor.u32 %v274, %v338
    %v403 = vxor.u32 %v275, %v339
    %v404 = vxor.u32 %v276, %v340
    %v405 = vxor.u32 %v277, %v341
    %v406 = vxor.u32 %v278, %v342
    %v407 = vxor.u32 %v279, %v343
    %v408 = vxor.u32 %v280, %v344
    %v409 = vxor.u32 %v281, %v345
    %v410 = vxor.u32 %v282, %v346
    %v411 = vxor.u32 %v283, %v347
    %v412 = vxor.u32 %v284, %v348
    %v413 = vxor.u32 %v285, %v349
    %v414 = vxor.u32 %v286, %v350
    %v415 = vxor.u32 %v287, %v351
    %v416 = vxor.u32 %v288, %v352
    %v417 = vxor.u32 %v289, %v353
    %v418 = vxor.u32 %v290, %v354
    %v419 = vxor.u32 %v291, %v355
    %v420 = vxor.u32 %v292, %v356
    %v421 = vxor.u32 %v293, %v357
    %v422 = vxor.u32 %v294, %v358
    %v423 = vxor.u32 %v295, %v359
    %v424 = vxor.u32 %v296, %v360
    %v425 = vxor.u32 %v297, %v361
    %v426 = vxor.u32 %v298, %v362
    %v427 = vxor.u32 %v299, %v363
    %v428 = vxor.u32 %v300, %v364
    %v429 = vxor.u32 %v301, %v365
    %v430 = vmul.u32 %v366, 2146121005
    %v431 = vmul.u32 %v367, 2146121005
    %v432 = vmul.u32 %v368, 2146121005
    %v433 = vmul.u32 %v369, 2146121005
    %v434 = vmul.u32 %v370, 2146121005
    %v435 = vmul.u32 %v371, 2146121005
    %v436 = vmul.u32 %v372, 2146121005
    %v437 = vmul.u32 %v373, 2146121005
    %v438 = vmul.u32 %v374, 2146121005
    %v439 = vmul.u32 %v375, 2146121005
    %v440 = vmul.u32 %v376, 2146121005
    %v441 = vmul.u32 %v377, 2146121005
    %v442 = vmul.u32 %v378, 2146121005
    %v443 = vmul.u32 %v379, 2146121005
    %v444 = vmul.u32 %v380, 2146121005
    %v445 = vmul.u32 %v381, 2146121005
    %v446 = vmul.u32 %v382, 2146121005
    %v447 = vmul.u32 %v383, 2146121005
    %v448 = vmul.u32 %v384, 2146121005
    %v449 = vmul.u32 %v385, 2146121005
    %v450 = vmul.u32 %v386, 2146121005
    %v451 = vmul.u32 %v387, 2146121005
    %v452 = vmul.u32 %v388, 2146121005
    %v453 = vmul.u32 %v389, 2146121005
    %v454 = vmul.u32 %v390, 2146121005
    %v455 = vmul.u32 %v391, 2146121005
    %v456 = vmul.u32 %v392, 2146121005
    %v457 = vmul.u32 %v393, 2146121005
    %v458 = vmul.u32 %v394, 2146121005
    %v459 = vmul.u32 %v395, 2146121005
    %v460 = vmul.u32 %v396, 2146121005
    %v461 = vmul.u32 %v397, 2146121005
    %v462 = vmul.u32 %v398, 2146121005
    %v463 = vmul.u32 %v399, 2146121005
    %v464 = vmul.u32 %v400, 2146121005
    %v465 = vmul.u32 %v401, 2146121005
    %v466 = vmul.u32 %v402, 2146121005
    %v467 = vmul.u32 %v403, 2146121005
    %v468 = vmul.u32 %v404, 2146121005
    %v469 = vmul.u32 %v405, 2146121005
    %v470 = vmul.u32 %v406, 2146121005
    %v471 = vmul.u32 %v407, 2146121005
    %v472 = vmul.u32 %v408, 2146121005
    %v473 = vmul.u32 %v409, 2146121005
    %v474 = vmul.u32 %v410, 2146121005
    %v475 = vmul.u32 %v411, 2146121005
    %v476 = vmul.u32 %v412, 2146121005
    %v477 = vmul.u32 %v413, 2146121005
    %v478 = vmul.u32 %v414, 2146121005
    %v479 = vmul.u32 %v415, 2146121005
    %v480 = vmul.u32 %v416, 2146121005
    %v481 = vmul.u32 %v417, 2146121005
    %v482 = vmul.u32 %v418, 2146121005
    %v483 = vmul.u32 %v419, 2146121005
    %v484 = vmul.u32 %v420, 2146121005
    %v485 = vmul.u32 %v421, 2146121005
    %v486 = vmul.u32 %v422, 2146121005
    %v487 = vmul.u32 %v423, 2146121005
    %v488 = vmul.u32 %v424, 2146121005
    %v489 = vmul.u32 %v425, 2146121005
    %v490 = vmul.u32 %v426, 2146121005
    %v491 = vmul.u32 %v427, 2146121005
    %v492 = vmul.u32 %v428, 2146121005
    %v493 = vmul.u32 %v429, 2146121005
    %v494 = vshrl.u32 %v430, 15
    %v495 = vshrl.u32 %v431, 15
    %v496 = vshrl.u32 %v432, 15
    %v497 = vshrl.u32 %v433, 15
    %v498 = vshrl.u32 %v434, 15
    %v499 = vshrl.u32 %v435, 15
    %v500 = vshrl.u32 %v436, 15
    %v501 = vshrl.u32 %v437, 15
    %v502 = vshrl.u32 %v438, 15
    %v503 = vshrl.u32 %v439, 15
    %v504 = vshrl.u32 %v440, 15
    %v505 = vshrl.u32 %v441, 15
    %v506 = vshrl.u32 %v442, 15
    %v507 = vshrl.u32 %v443, 15
    %v508 = vshrl.u32 %v444, 15
    %v509 = vshrl.u32 %v445, 15
    %v510 = vshrl.u32 %v446, 15
    %v511 = vshrl.u32 %v447, 15
    %v512 = vshrl.u32 %v448, 15
    %v513 = vshrl.u32 %v449, 15
    %v514 = vshrl.u32 %v450, 15
    %v515 = vshrl.u32 %v451, 15
    %v516 = vshrl.u32 %v452, 15
    %v517 = vshrl.u32 %v453, 15
    %v518 = vshrl.u32 %v454, 15
    %v519 = vshrl.u32 %v455, 15
    %v520 = vshrl.u32 %v456, 15
    %v521 = vshrl.u32 %v457, 15
    %v522 = vshrl.u32 %v458, 15
    %v523 = vshrl.u32 %v459, 15
    %v524 = vshrl.u32 %v460, 15
    %v525 = vshrl.u32 %v461, 15
    %v526 = vshrl.u32 %v462, 15
    %v527 = vshrl.u32 %v463, 15
    %v528 = vshrl.u32 %v464, 15
    %v529 = vshrl.u32 %v465, 15
    %v530 = vshrl.u32 %v466, 15
    %v531 = vshrl.u32 %v467, 15
    %v532 = vshrl.u32 %v468, 15
    %v533 = vshrl.u32 %v469, 15
    %v534 = vshrl.u32 %v470, 15
    %v535 = vshrl.u32 %v471, 15
    %v536 = vshrl.u32 %v472, 15
    %v537 = vshrl.u32 %v473, 15
    %v538 = vshrl.u32 %v474, 15
    %v539 = vshrl.u32 %v475, 15
    %v540 = vshrl.u32 %v476, 15
    %v541 = vshrl.u32 %v477, 15
    %v542 = vshrl.u32 %v478, 15
    %v543 = vshrl.u32 %v479, 15
    %v544 = vshrl.u32 %v480, 15
    %v545 = vshrl.u32 %v481, 15
    %v546 = vshrl.u32 %v482, 15
    %v547 = vshrl.u32 %v483, 15
    %v548 = vshrl.u32 %v484, 15
    %v549 = vshrl.u32 %v485, 15
    %v550 = vshrl.u32 %v486, 15
    %v551 = vshrl.u32 %v487, 15
    %v552 = vshrl.u32 %v488, 15
    %v553 = vshrl.u32 %v489, 15
    %v554 = vshrl.u32 %v490, 15
    %v555 = vshrl.u32 %v491, 15
    %v556 = vshrl.u32 %v492, 15
    %v557 = vshrl.u32 %v493, 15
    %v558 = vxor.u32 %v430, %v494
    %v559 = vxor.u32 %v431, %v495
    %v560 = vxor.u32 %v432, %v496
    %v561 = vxor.u32 %v433, %v497
    %v562 = vxor.u32 %v434, %v498
    %v563 = vxor.u32 %v435, %v499
    %v564 = vxor.u32 %v436, %v500
    %v565 = vxor.u32 %v437, %v501
    %v566 = vxor.u32 %v438, %v502
    %v567 = vxor.u32 %v439, %v503
    %v568 = vxor.u32 %v440, %v504
    %v569 = vxor.u32 %v441, %v505
    %v570 = vxor.u32 %v442, %v506
    %v571 = vxor.u32 %v443, %v507
    %v572 = vxor.u32 %v444, %v508
    %v573 = vxor.u32 %v445, %v509
    %v574 = vxor.u32 %v446, %v510
    %v575 = vxor.u32 %v447, %v511
    %v576 = vxor.u32 %v448, %v512
    %v577 = vxor.u32 %v449, %v513
    %v578 = vxor.u32 %v450, %v514
    %v579 = vxor.u32 %v451, %v515
    %v580 = vxor.u32 %v452, %v516
    %v581 = vxor.u32 %v453, %v517
    %v582 = vxor.u32 %v454, %v518
    %v583 = vxor.u32 %v455, %v519
    %v584 = vxor.u32 %v456, %v520
    %v585 = vxor.u32 %v457, %v521
    %v586 = vxor.u32 %v458, %v522
    %v587 = vxor.u32 %v459, %v523
    %v588 = vxor.u32 %v460, %v524
    %v589 = vxor.u32 %v461, %v525
    %v590 = vxor.u32 %v462, %v526
    %v591 = vxor.u32 %v463, %v527
    %v592 = vxor.u32 %v464, %v528
    %v593 = vxor.u32 %v465, %v529
    %v594 = vxor.u32 %v466, %v530
    %v595 = vxor.u32 %v467, %v531
    %v596 = vxor.u32 %v468, %v532
    %v597 = vxor.u32 %v469, %v533
    %v598 = vxor.u32 %v470, %v534
    %v599 = vxor.u32 %v471, %v535
    %v600 = vxor.u32 %v472, %v536
    %v601 = vxor.u32 %v473, %v537
    %v602 = vxor.u32 %v474, %v538
    %v603 = vxor.u32 %v475, %v539
    %v604 = vxor.u32 %v476, %v540
    %v605 = vxor.u32 %v477, %v541
    %v606 = vxor.u32 %v478, %v542
    %v607 = vxor.u32 %v479, %v543
    %v608 = vxor.u32 %v480, %v544
    %v609 = vxor.u32 %v481, %v545
    %v610 = vxor.u32 %v482, %v546
    %v611 = vxor.u32 %v483, %v547
    %v612 = vxor.u32 %v484, %v548
    %v613 = vxor.u32 %v485, %v549
    %v614 = vxor.u32 %v486, %v550
    %v615 = vxor.u32 %v487, %v551
    %v616 = vxor.u32 %v488, %v552
    %v617 = vxor.u32 %v489, %v553
    %v618 = vxor.u32 %v490, %v554
    %v619 = vxor.u32 %v491, %v555
    %v620 = vxor.u32 %v492, %v556
    %v621 = vxor.u32 %v493, %v557
    %v622 = vmul.u32 %v558, 2221713035
    %v623 = vmul.u32 %v559, 2221713035
    %v624 = vmul.u32 %v560, 2221713035
    %v625 = vmul.u32 %v561, 2221713035
    %v626 = vmul.u32 %v562, 2221713035
    %v627 = vmul.u32 %v563, 2221713035
    %v628 = vmul.u32 %v564, 2221713035
    %v629 = vmul.u32 %v565, 2221713035
    %v630 = vmul.u32 %v566, 2221713035
    %v631 = vmul.u32 %v567, 2221713035
    %v632 = vmul.u32 %v568, 2221713035
    %v633 = vmul.u32 %v569, 2221713035
    %v634 = vmul.u32 %v570, 2221713035
    %v635 = vmul.u32 %v571, 2221713035
    %v636 = vmul.u32 %v572, 2221713035
    %v637 = vmul.u32 %v573, 2221713035
    %v638 = vmul.u32 %v574, 2221713035
    %v639 = vmul.u32 %v575, 2221713035
    %v640 = vmul.u32 %v576, 2221713035
    %v641 = vmul.u32 %v577, 2221713035
    %v642 = vmul.u32 %v578, 2221713035
    %v643 = vmul.u32 %v579, 2221713035
    %v644 = vmul.u32 %v580, 2221713035
    %v645 = vmul.u32 %v581, 2221713035
    %v646 = vmul.u32 %v582, 2221713035
    %v647 = vmul.u32 %v583, 2221713035
    %v648 = vmul.u32 %v584, 2221713035
    %v649 = vmul.u32 %v585, 2221713035
    %v650 = vmul.u32 %v586, 2221713035
    %v651 = vmul.u32 %v587, 2221713035
    %v652 = vmul.u32 %v588, 2221713035
    %v653 = vmul.u32 %v589, 2221713035
    %v654 = vmul.u32 %v590, 2221713035
    %v655 = vmul.u32 %v591, 2221713035
    %v656 = vmul.u32 %v592, 2221713035
    %v657 = vmul.u32 %v593, 2221713035
    %v658 = vmul.u32 %v594, 2221713035
    %v659 = vmul.u32 %v595, 2221713035
    %v660 = vmul.u32 %v596, 2221713035
    %v661 = vmul.u32 %v597, 2221713035
    %v662 = vmul.u32 %v598, 2221713035
    %v663 = vmul.u32 %v599, 2221713035
    %v664 = vmul.u32 %v600, 2221713035
    %v665 = vmul.u32 %v601, 2221713035
    %v666 = vmul.u32 %v602, 2221713035
    %v667 = vmul.u32 %v603, 2221713035
    %v668 = vmul.u32 %v604, 2221713035
    %v669 = vmul.u32 %v605, 2221713035
    %v670 = vmul.u32 %v606, 2221713035
    %v671 = vmul.u32 %v607, 2221713035
    %v672 = vmul.u32 %v608, 2221713035
    %v673 = vmul.u32 %v609, 2221713035
    %v674 = vmul.u32 %v610, 2221713035
    %v675 = vmul.u32 %v611, 2221713035
    %v676 = vmul.u32 %v612, 2221713035
    %v677 = vmul.u32 %v613, 2221713035
    %v678 = vmul.u32 %v614, 2221713035
    %v679 = vmul.u32 %v615, 2221713035
    %v680 = vmul.u32 %v616, 2221713035
    %v681 = vmul.u32 %v617, 2221713035
    %v682 = vmul.u32 %v618, 2221713035
    %v683 = vmul.u32 %v619, 2221713035
    %v684 = vmul.u32 %v620, 2221713035
    %v685 = vmul.u32 %v621, 2221713035
    %v686 = vshrl.u32 %v622, 16
    %v687 = vshrl.u32 %v623, 16
    %v688 = vshrl.u32 %v624, 16
    %v689 = vshrl.u32 %v625, 16
    %v690 = vshrl.u32 %v626, 16
    %v691 = vshrl.u32 %v627, 16
    %v692 = vshrl.u32 %v628, 16
    %v693 = vshrl.u32 %v629, 16
    %v694 = vshrl.u32 %v630, 16
    %v695 = vshrl.u32 %v631, 16
    %v696 = vshrl.u32 %v632, 16
    %v697 = vshrl.u32 %v633, 16
    %v698 = vshrl.u32 %v634, 16
    %v699 = vshrl.u32 %v635, 16
    %v700 = vshrl.u32 %v636, 16
    %v701 = vshrl.u32 %v637, 16
    %v702 = vshrl.u32 %v638, 16
    %v703 = vshrl.u32 %v639, 16
    %v704 = vshrl.u32 %v640, 16
    %v705 = vshrl.u32 %v641, 16
    %v706 = vshrl.u32 %v642, 16
    %v707 = vshrl.u32 %v643, 16
    %v708 = vshrl.u32 %v644, 16
    %v709 = vshrl.u32 %v645, 16
    %v710 = vshrl.u32 %v646, 16
    %v711 = vshrl.u32 %v647, 16
    %v712 = vshrl.u32 %v648, 16
    %v713 = vshrl.u32 %v649, 16
    %v714 = vshrl.u32 %v650, 16
    %v715 = vshrl.u32 %v651, 16
    %v716 = vshrl.u32 %v652, 16
    %v717 = vshrl.u32 %v653, 16
    %v718 = vshrl.u32 %v654, 16
    %v719 = vshrl.u32 %v655, 16
    %v720 = vshrl.u32 %v656, 16
    %v721 = vshrl.u32 %v657, 16
    %v722 = vshrl.u32 %v658, 16
    %v723 = vshrl.u32 %v659, 16
    %v724 = vshrl.u32 %v660, 16
    %v725 = vshrl.u32 %v661, 16
    %v726 = vshrl.u32 %v662, 16
    %v727 = vshrl.u32 %v663, 16
    %v728 = vshrl.u32 %v664, 16
    %v729 = vshrl.u32 %v665, 16
    %v730 = vshrl.u32 %v666, 16
    %v731 = vshrl.u32 %v667, 16
    %v732 = vshrl.u32 %v668, 16
    %v733 = vshrl.u32 %v669, 16
    %v734 = vshrl.u32 %v670, 16
    %v735 = vshrl.u32 %v671, 16
    %v736 = vshrl.u32 %v672, 16
    %v737 = vshrl.u32 %v673, 16
    %v738 = vshrl.u32 %v674, 16
    %v739 = vshrl.u32 %v675, 16
    %v740 = vshrl.u32 %v676, 16
    %v741 = vshrl.u32 %v677, 16
    %v742 = vshrl.u32 %v678, 16
    %v743 = vshrl.u32 %v679, 16
    %v744 = vshrl.u32 %v680, 16
    %v745 = vshrl.u32 %v681, 16
    %v746 = vshrl.u32 %v682, 16
    %v747 = vshrl.u32 %v683, 16
    %v748 = vshrl.u32 %v684, 16
    %v749 = vshrl.u32 %v685, 16
    %v750 = vxor.u32 %v622, %v686
    %v751 = vxor.u32 %v623, %v687
    %v752 = vxor.u32 %v624, %v688
    %v753 = vxor.u32 %v625, %v689
    %v754 = vxor.u32 %v626, %v690
    %v755 = vxor.u32 %v627, %v691
    %v756 = vxor.u32 %v628, %v692
    %v757 = vxor.u32 %v629, %v693
    %v758 = vxor.u32 %v630, %v694
    %v759 = vxor.u32 %v631, %v695
    %v760 = vxor.u32 %v632, %v696
    %v761 = vxor.u32 %v633, %v697
    %v762 = vxor.u32 %v634, %v698
    %v763 = vxor.u32 %v635, %v699
    %v764 = vxor.u32 %v636, %v700
    %v765 = vxor.u32 %v637, %v701
    %v766 = vxor.u32 %v638, %v702
    %v767 = vxor.u32 %v639, %v703
    %v768 = vxor.u32 %v640, %v704
    %v769 = vxor.u32 %v641, %v705
    %v770 = vxor.u32 %v642, %v706
    %v771 = vxor.u32 %v643, %v707
    %v772 = vxor.u32 %v644, %v708
    %v773 = vxor.u32 %v645, %v709
    %v774 = vxor.u32 %v646, %v710
    %v775 = vxor.u32 %v647, %v711
    %v776 = vxor.u32 %v648, %v712
    %v777 = vxor.u32 %v649, %v713
    %v778 = vxor.u32 %v650, %v714
    %v779 = vxor.u32 %v651, %v715
    %v780 = vxor.u32 %v652, %v716
    %v781 = vxor.u32 %v653, %v717
    %v782 = vxor.u32 %v654, %v718
    %v783 = vxor.u32 %v655, %v719
    %v784 = vxor.u32 %v656, %v720
    %v785 = vxor.u32 %v657, %v721
    %v786 = vxor.u32 %v658, %v722
    %v787 = vxor.u32 %v659, %v723
    %v788 = vxor.u32 %v660, %v724
    %v789 = vxor.u32 %v661, %v725
    %v790 = vxor.u32 %v662, %v726
    %v791 = vxor.u32 %v663, %v727
    %v792 = vxor.u32 %v664, %v728
    %v793 = vxor.u32 %v665, %v729
    %v794 = vxor.u32 %v666, %v730
    %v795 = vxor.u32 %v667, %v731
    %v796 = vxor.u32 %v668, %v732
    %v797 = vxor.u32 %v669, %v733
    %v798 = vxor.u32 %v670, %v734
    %v799 = vxor.u32 %v671, %v735
    %v800 = vxor.u32 %v672, %v736
    %v801 = vxor.u32 %v673, %v737
    %v802 = vxor.u32 %v674, %v738
    %v803 = vxor.u32 %v675, %v739
    %v804 = vxor.u32 %v676, %v740
    %v805 = vxor.u32 %v677, %v741
    %v806 = vxor.u32 %v678, %v742
    %v807 = vxor.u32 %v679, %v743
    %v808 = vxor.u32 %v680, %v744
    %v809 = vxor.u32 %v681, %v745
    %v810 = vxor.u32 %v682, %v746
    %v811 = vxor.u32 %v683, %v747
    %v812 = vxor.u32 %v684, %v748
    %v813 = vxor.u32 %v685, %v749
    %vm814 = vcmp.ge.u32.totalorder %v750, 429496729
    %vm815 = vcmp.ge.u32.totalorder %v751, 429496729
    %vm816 = vcmp.ge.u32.totalorder %v752, 429496729
    %vm817 = vcmp.ge.u32.totalorder %v753, 429496729
    %vm818 = vcmp.ge.u32.totalorder %v754, 429496729
    %vm819 = vcmp.ge.u32.totalorder %v755, 429496729
    %vm820 = vcmp.ge.u32.totalorder %v756, 429496729
    %vm821 = vcmp.ge.u32.totalorder %v757, 429496729
    %vm822 = vcmp.ge.u32.totalorder %v758, 429496729
    %vm823 = vcmp.ge.u32.totalorder %v759, 429496729
    %vm824 = vcmp.ge.u32.totalorder %v760, 429496729
    %vm825 = vcmp.ge.u32.totalorder %v761, 429496729
    %vm826 = vcmp.ge.u32.totalorder %v762, 429496729
    %vm827 = vcmp.ge.u32.totalorder %v763, 429496729
    %vm828 = vcmp.ge.u32.totalorder %v764, 429496729
    %vm829 = vcmp.ge.u32.totalorder %v765, 429496729
    %vm830 = vcmp.ge.u32.totalorder %v766, 429496729
    %vm831 = vcmp.ge.u32.totalorder %v767, 429496729
    %vm832 = vcmp.ge.u32.totalorder %v768, 429496729
    %vm833 = vcmp.ge.u32.totalorder %v769, 429496729
    %vm834 = vcmp.ge.u32.totalorder %v770, 429496729
    %vm835 = vcmp.ge.u32.totalorder %v771, 429496729
    %vm836 = vcmp.ge.u32.totalorder %v772, 429496729
    %vm837 = vcmp.ge.u32.totalorder %v773, 429496729
    %vm838 = vcmp.ge.u32.totalorder %v774, 429496729
    %vm839 = vcmp.ge.u32.totalorder %v775, 429496729
    %vm840 = vcmp.ge.u32.totalorder %v776, 429496729
    %vm841 = vcmp.ge.u32.totalorder %v777, 429496729
    %vm842 = vcmp.ge.u32.totalorder %v778, 429496729
    %vm843 = vcmp.ge.u32.totalorder %v779, 429496729
    %vm844 = vcmp.ge.u32.totalorder %v780, 429496729
    %vm845 = vcmp.ge.u32.totalorder %v781, 429496729
    %vm846 = vcmp.ge.u32.totalorder %v782, 429496729
    %vm847 = vcmp.ge.u32.totalorder %v783, 429496729
    %vm848 = vcmp.ge.u32.totalorder %v784, 429496729
    %vm849 = vcmp.ge.u32.totalorder %v785, 429496729
    %vm850 = vcmp.ge.u32.totalorder %v786, 429496729
    %vm851 = vcmp.ge.u32.totalorder %v787, 429496729
    %vm852 = vcmp.ge.u32.totalorder %v788, 429496729
    %vm853 = vcmp.ge.u32.totalorder %v789, 429496729
    %vm854 = vcmp.ge.u32.totalorder %v790, 429496729
    %vm855 = vcmp.ge.u32.totalorder %v791, 429496729
    %vm856 = vcmp.ge.u32.totalorder %v792, 429496729
    %vm857 = vcmp.ge.u32.totalorder %v793, 429496729
    %vm858 = vcmp.ge.u32.totalorder %v794, 429496729
    %vm859 = vcmp.ge.u32.totalorder %v795, 429496729
    %vm860 = vcmp.ge.u32.totalorder %v796, 429496729
    %vm861 = vcmp.ge.u32.totalorder %v797, 429496729
    %vm862 = vcmp.ge.u32.totalorder %v798, 429496729
    %vm863 = vcmp.ge.u32.totalorder %v799, 429496729
    %vm864 = vcmp.ge.u32.totalorder %v800, 429496729
    %vm865 = vcmp.ge.u32.totalorder %v801, 429496729
    %vm866 = vcmp.ge.u32.totalorder %v802, 429496729
    %vm867 = vcmp.ge.u32.totalorder %v803, 429496729
    %vm868 = vcmp.ge.u32.totalorder %v804, 429496729
    %vm869 = vcmp.ge.u32.totalorder %v805, 429496729
    %vm870 = vcmp.ge.u32.totalorder %v806, 429496729
    %vm871 = vcmp.ge.u32.totalorder %v807, 429496729
    %vm872 = vcmp.ge.u32.totalorder %v808, 429496729
    %vm873 = vcmp.ge.u32.totalorder %v809, 429496729
    %vm874 = vcmp.ge.u32.totalorder %v810, 429496729
    %vm875 = vcmp.ge.u32.totalorder %v811, 429496729
    %vm876 = vcmp.ge.u32.totalorder %v812, 429496729
    %vm877 = vcmp.ge.u32.totalorder %v813, 429496729
    %v878 = vld [vmem:[%s1] sm:$0xff]
    %v879 = vld [vmem:[%s1 + $0x8] sm:$0xff]
    %v880 = vld [vmem:[%s1 + $0x10] sm:$0xff]
    %v881 = vld [vmem:[%s1 + $0x18] sm:$0xff]
    %v882 = vld [vmem:[%s1 + $0x20] sm:$0xff]
    %v883 = vld [vmem:[%s1 + $0x28] sm:$0xff]
    %v884 = vld [vmem:[%s1 + $0x30] sm:$0xff]
    %v885 = vld [vmem:[%s1 + $0x38] sm:$0xff]
    %v886 = vld [vmem:[%s1 + $0x40] sm:$0xff]
    %v887 = vld [vmem:[%s1 + $0x48] sm:$0xff]
    %v888 = vld [vmem:[%s1 + $0x50] sm:$0xff]
    %v889 = vld [vmem:[%s1 + $0x58] sm:$0xff]
    %v890 = vld [vmem:[%s1 + $0x60] sm:$0xff]
    %v891 = vld [vmem:[%s1 + $0x68] sm:$0xff]
    %v892 = vld [vmem:[%s1 + $0x70] sm:$0xff]
    %v893 = vld [vmem:[%s1 + $0x78] sm:$0xff]
    %v894 = vld [vmem:[%s1 + $0x80] sm:$0xff]
    %v895 = vld [vmem:[%s1 + $0x88] sm:$0xff]
    %v896 = vld [vmem:[%s1 + $0x90] sm:$0xff]
    %v897 = vld [vmem:[%s1 + $0x98] sm:$0xff]
    %v898 = vld [vmem:[%s1 + $0xa0] sm:$0xff]
    %v899 = vld [vmem:[%s1 + $0xa8] sm:$0xff]
    %v900 = vld [vmem:[%s1 + $0xb0] sm:$0xff]
    %v901 = vld [vmem:[%s1 + $0xb8] sm:$0xff]
    %v902 = vld [vmem:[%s1 + $0xc0] sm:$0xff]
    %v903 = vld [vmem:[%s1 + $0xc8] sm:$0xff]
    %v904 = vld [vmem:[%s1 + $0xd0] sm:$0xff]
    %v905 = vld [vmem:[%s1 + $0xd8] sm:$0xff]
    %v906 = vld [vmem:[%s1 + $0xe0] sm:$0xff]
    %v907 = vld [vmem:[%s1 + $0xe8] sm:$0xff]
    %v908 = vld [vmem:[%s1 + $0xf0] sm:$0xff]
    %v909 = vld [vmem:[%s1 + $0xf8] sm:$0xff]
    %v910 = vld [vmem:[%s1 + $0x100] sm:$0xff]
    %v911 = vld [vmem:[%s1 + $0x108] sm:$0xff]
    %v912 = vld [vmem:[%s1 + $0x110] sm:$0xff]
    %v913 = vld [vmem:[%s1 + $0x118] sm:$0xff]
    %v914 = vld [vmem:[%s1 + $0x120] sm:$0xff]
    %v915 = vld [vmem:[%s1 + $0x128] sm:$0xff]
    %v916 = vld [vmem:[%s1 + $0x130] sm:$0xff]
    %v917 = vld [vmem:[%s1 + $0x138] sm:$0xff]
    %v918 = vld [vmem:[%s1 + $0x140] sm:$0xff]
    %v919 = vld [vmem:[%s1 + $0x148] sm:$0xff]
    %v920 = vld [vmem:[%s1 + $0x150] sm:$0xff]
    %v921 = vld [vmem:[%s1 + $0x158] sm:$0xff]
    %v922 = vld [vmem:[%s1 + $0x160] sm:$0xff]
    %v923 = vld [vmem:[%s1 + $0x168] sm:$0xff]
    %v924 = vld [vmem:[%s1 + $0x170] sm:$0xff]
    %v925 = vld [vmem:[%s1 + $0x178] sm:$0xff]
    %v926 = vld [vmem:[%s1 + $0x180] sm:$0xff]
    %v927 = vld [vmem:[%s1 + $0x188] sm:$0xff]
    %v928 = vld [vmem:[%s1 + $0x190] sm:$0xff]
    %v929 = vld [vmem:[%s1 + $0x198] sm:$0xff]
    %v930 = vld [vmem:[%s1 + $0x1a0] sm:$0xff]
    %v931 = vld [vmem:[%s1 + $0x1a8] sm:$0xff]
    %v932 = vld [vmem:[%s1 + $0x1b0] sm:$0xff]
    %v933 = vld [vmem:[%s1 + $0x1b8] sm:$0xff]
    %v934 = vld [vmem:[%s1 + $0x1c0] sm:$0xff]
    %v935 = vld [vmem:[%s1 + $0x1c8] sm:$0xff]
    %v936 = vld [vmem:[%s1 + $0x1d0] sm:$0xff]
    %v937 = vld [vmem:[%s1 + $0x1d8] sm:$0xff]
    %v938 = vld [vmem:[%s1 + $0x1e0] sm:$0xff]
    %v939 = vld [vmem:[%s1 + $0x1e8] sm:$0xff]
    %v940 = vld [vmem:[%s1 + $0x1f0] sm:$0xff]
    %v941 = vld [vmem:[%s1 + $0x1f8] sm:$0xff]
    %v942 = vsel %vm814, %v878, 0.0
    %v943 = vsel %vm815, %v879, 0.0
    %v944 = vsel %vm816, %v880, 0.0
    %v945 = vsel %vm817, %v881, 0.0
    %v946 = vsel %vm818, %v882, 0.0
    %v947 = vsel %vm819, %v883, 0.0
    %v948 = vsel %vm820, %v884, 0.0
    %v949 = vsel %vm821, %v885, 0.0
    %v950 = vsel %vm822, %v886, 0.0
    %v951 = vsel %vm823, %v887, 0.0
    %v952 = vsel %vm824, %v888, 0.0
    %v953 = vsel %vm825, %v889, 0.0
    %v954 = vsel %vm826, %v890, 0.0
    %v955 = vsel %vm827, %v891, 0.0
    %v956 = vsel %vm828, %v892, 0.0
    %v957 = vsel %vm829, %v893, 0.0
    %v958 = vsel %vm830, %v894, 0.0
    %v959 = vsel %vm831, %v895, 0.0
    %v960 = vsel %vm832, %v896, 0.0
    %v961 = vsel %vm833, %v897, 0.0
    %v962 = vsel %vm834, %v898, 0.0
    %v963 = vsel %vm835, %v899, 0.0
    %v964 = vsel %vm836, %v900, 0.0
    %v965 = vsel %vm837, %v901, 0.0
    %v966 = vsel %vm838, %v902, 0.0
    %v967 = vsel %vm839, %v903, 0.0
    %v968 = vsel %vm840, %v904, 0.0
    %v969 = vsel %vm841, %v905, 0.0
    %v970 = vsel %vm842, %v906, 0.0
    %v971 = vsel %vm843, %v907, 0.0
    %v972 = vsel %vm844, %v908, 0.0
    %v973 = vsel %vm845, %v909, 0.0
    %v974 = vsel %vm846, %v910, 0.0
    %v975 = vsel %vm847, %v911, 0.0
    %v976 = vsel %vm848, %v912, 0.0
    %v977 = vsel %vm849, %v913, 0.0
    %v978 = vsel %vm850, %v914, 0.0
    %v979 = vsel %vm851, %v915, 0.0
    %v980 = vsel %vm852, %v916, 0.0
    %v981 = vsel %vm853, %v917, 0.0
    %v982 = vsel %vm854, %v918, 0.0
    %v983 = vsel %vm855, %v919, 0.0
    %v984 = vsel %vm856, %v920, 0.0
    %v985 = vsel %vm857, %v921, 0.0
    %v986 = vsel %vm858, %v922, 0.0
    %v987 = vsel %vm859, %v923, 0.0
    %v988 = vsel %vm860, %v924, 0.0
    %v989 = vsel %vm861, %v925, 0.0
    %v990 = vsel %vm862, %v926, 0.0
    %v991 = vsel %vm863, %v927, 0.0
    %v992 = vsel %vm864, %v928, 0.0
    %v993 = vsel %vm865, %v929, 0.0
    %v994 = vsel %vm866, %v930, 0.0
    %v995 = vsel %vm867, %v931, 0.0
    %v996 = vsel %vm868, %v932, 0.0
    %v997 = vsel %vm869, %v933, 0.0
    %v998 = vsel %vm870, %v934, 0.0
    %v999 = vsel %vm871, %v935, 0.0
    %v1000 = vsel %vm872, %v936, 0.0
    %v1001 = vsel %vm873, %v937, 0.0
    %v1002 = vsel %vm874, %v938, 0.0
    %v1003 = vsel %vm875, %v939, 0.0
    %v1004 = vsel %vm876, %v940, 0.0
    %v1005 = vsel %vm877, %v941, 0.0
    %v1006 = vpack.c.bf16 %v943, %v942
    %v1007 = vpack.c.bf16 %v945, %v944
    %v1008 = vpack.c.bf16 %v947, %v946
    %v1009 = vpack.c.bf16 %v949, %v948
    %v1010 = vpack.c.bf16 %v951, %v950
    %v1011 = vpack.c.bf16 %v953, %v952
    %v1012 = vpack.c.bf16 %v955, %v954
    %v1013 = vpack.c.bf16 %v957, %v956
    %v1014 = vpack.c.bf16 %v959, %v958
    %v1015 = vpack.c.bf16 %v961, %v960
    %v1016 = vpack.c.bf16 %v963, %v962
    %v1017 = vpack.c.bf16 %v965, %v964
    %v1018 = vpack.c.bf16 %v967, %v966
    %v1019 = vpack.c.bf16 %v969, %v968
    %v1020 = vpack.c.bf16 %v971, %v970
    %v1021 = vpack.c.bf16 %v973, %v972
    %v1022 = vpack.c.bf16 %v975, %v974
    %v1023 = vpack.c.bf16 %v977, %v976
    %v1024 = vpack.c.bf16 %v979, %v978
    %v1025 = vpack.c.bf16 %v981, %v980
    %v1026 = vpack.c.bf16 %v983, %v982
    %v1027 = vpack.c.bf16 %v985, %v984
    %v1028 = vpack.c.bf16 %v987, %v986
    %v1029 = vpack.c.bf16 %v989, %v988
    %v1030 = vpack.c.bf16 %v991, %v990
    %v1031 = vpack.c.bf16 %v993, %v992
    %v1032 = vpack.c.bf16 %v995, %v994
    %v1033 = vpack.c.bf16 %v997, %v996
    %v1034 = vpack.c.bf16 %v999, %v998
    %v1035 = vpack.c.bf16 %v1001, %v1000
    %v1036 = vpack.c.bf16 %v1003, %v1002
    %v1037 = vpack.c.bf16 %v1005, %v1004
    %v1038 = vld [vmem:[%s2] sm:$0xff]
    %v1039 = vld [vmem:[%s2 + $0x8] sm:$0xff]
    %v1040 = vld [vmem:[%s2 + $0x10] sm:$0xff]
    %v1041 = vld [vmem:[%s2 + $0x18] sm:$0xff]
    %v1042 = vld [vmem:[%s2 + $0x20] sm:$0xff]
    %v1043 = vld [vmem:[%s2 + $0x28] sm:$0xff]
    %v1044 = vld [vmem:[%s2 + $0x30] sm:$0xff]
    %v1045 = vld [vmem:[%s2 + $0x38] sm:$0xff]
    %v1046 = vld [vmem:[%s2 + $0x40] sm:$0xff]
    %v1047 = vld [vmem:[%s2 + $0x48] sm:$0xff]
    %v1048 = vld [vmem:[%s2 + $0x50] sm:$0xff]
    %v1049 = vld [vmem:[%s2 + $0x58] sm:$0xff]
    %v1050 = vld [vmem:[%s2 + $0x60] sm:$0xff]
    %v1051 = vld [vmem:[%s2 + $0x68] sm:$0xff]
    %v1052 = vld [vmem:[%s2 + $0x70] sm:$0xff]
    %v1053 = vld [vmem:[%s2 + $0x78] sm:$0xff]
    %v1054 = vld [vmem:[%s2 + $0x80] sm:$0xff]
    %v1055 = vld [vmem:[%s2 + $0x88] sm:$0xff]
    %v1056 = vld [vmem:[%s2 + $0x90] sm:$0xff]
    %v1057 = vld [vmem:[%s2 + $0x98] sm:$0xff]
    %v1058 = vld [vmem:[%s2 + $0xa0] sm:$0xff]
    %v1059 = vld [vmem:[%s2 + $0xa8] sm:$0xff]
    %v1060 = vld [vmem:[%s2 + $0xb0] sm:$0xff]
    %v1061 = vld [vmem:[%s2 + $0xb8] sm:$0xff]
    %v1062 = vld [vmem:[%s2 + $0xc0] sm:$0xff]
    %v1063 = vld [vmem:[%s2 + $0xc8] sm:$0xff]
    %v1064 = vld [vmem:[%s2 + $0xd0] sm:$0xff]
    %v1065 = vld [vmem:[%s2 + $0xd8] sm:$0xff]
    %v1066 = vld [vmem:[%s2 + $0xe0] sm:$0xff]
    %v1067 = vld [vmem:[%s2 + $0xe8] sm:$0xff]
    %v1068 = vld [vmem:[%s2 + $0xf0] sm:$0xff]
    %v1069 = vld [vmem:[%s2 + $0xf8] sm:$0xff]
    %v1070 = vld [vmem:[%s2 + $0x100] sm:$0xff]
    %v1071 = vld [vmem:[%s2 + $0x108] sm:$0xff]
    %v1072 = vld [vmem:[%s2 + $0x110] sm:$0xff]
    %v1073 = vld [vmem:[%s2 + $0x118] sm:$0xff]
    %v1074 = vld [vmem:[%s2 + $0x120] sm:$0xff]
    %v1075 = vld [vmem:[%s2 + $0x128] sm:$0xff]
    %v1076 = vld [vmem:[%s2 + $0x130] sm:$0xff]
    %v1077 = vld [vmem:[%s2 + $0x138] sm:$0xff]
    %v1078 = vld [vmem:[%s2 + $0x140] sm:$0xff]
    %v1079 = vld [vmem:[%s2 + $0x148] sm:$0xff]
    %v1080 = vld [vmem:[%s2 + $0x150] sm:$0xff]
    %v1081 = vld [vmem:[%s2 + $0x158] sm:$0xff]
    %v1082 = vld [vmem:[%s2 + $0x160] sm:$0xff]
    %v1083 = vld [vmem:[%s2 + $0x168] sm:$0xff]
    %v1084 = vld [vmem:[%s2 + $0x170] sm:$0xff]
    %v1085 = vld [vmem:[%s2 + $0x178] sm:$0xff]
    %v1086 = vld [vmem:[%s2 + $0x180] sm:$0xff]
    %v1087 = vld [vmem:[%s2 + $0x188] sm:$0xff]
    %v1088 = vld [vmem:[%s2 + $0x190] sm:$0xff]
    %v1089 = vld [vmem:[%s2 + $0x198] sm:$0xff]
    %v1090 = vld [vmem:[%s2 + $0x1a0] sm:$0xff]
    %v1091 = vld [vmem:[%s2 + $0x1a8] sm:$0xff]
    %v1092 = vld [vmem:[%s2 + $0x1b0] sm:$0xff]
    %v1093 = vld [vmem:[%s2 + $0x1b8] sm:$0xff]
    %v1094 = vld [vmem:[%s2 + $0x1c0] sm:$0xff]
    %v1095 = vld [vmem:[%s2 + $0x1c8] sm:$0xff]
    %v1096 = vld [vmem:[%s2 + $0x1d0] sm:$0xff]
    %v1097 = vld [vmem:[%s2 + $0x1d8] sm:$0xff]
    %v1098 = vld [vmem:[%s2 + $0x1e0] sm:$0xff]
    %v1099 = vld [vmem:[%s2 + $0x1e8] sm:$0xff]
    %v1100 = vld [vmem:[%s2 + $0x1f0] sm:$0xff]
    %v1101 = vld [vmem:[%s2 + $0x1f8] sm:$0xff]
    %v1102 = vpack.c.bf16 %v1039, %v1038
    %v1103 = vpack.c.bf16 %v1041, %v1040
    %v1104 = vpack.c.bf16 %v1043, %v1042
    %v1105 = vpack.c.bf16 %v1045, %v1044
    %v1106 = vpack.c.bf16 %v1047, %v1046
    %v1107 = vpack.c.bf16 %v1049, %v1048
    %v1108 = vpack.c.bf16 %v1051, %v1050
    %v1109 = vpack.c.bf16 %v1053, %v1052
    %v1110 = vpack.c.bf16 %v1055, %v1054
    %v1111 = vpack.c.bf16 %v1057, %v1056
    %v1112 = vpack.c.bf16 %v1059, %v1058
    %v1113 = vpack.c.bf16 %v1061, %v1060
    %v1114 = vpack.c.bf16 %v1063, %v1062
    %v1115 = vpack.c.bf16 %v1065, %v1064
    %v1116 = vpack.c.bf16 %v1067, %v1066
    %v1117 = vpack.c.bf16 %v1069, %v1068
    %v1118 = vpack.c.bf16 %v1071, %v1070
    %v1119 = vpack.c.bf16 %v1073, %v1072
    %v1120 = vpack.c.bf16 %v1075, %v1074
    %v1121 = vpack.c.bf16 %v1077, %v1076
    %v1122 = vpack.c.bf16 %v1079, %v1078
    %v1123 = vpack.c.bf16 %v1081, %v1080
    %v1124 = vpack.c.bf16 %v1083, %v1082
    %v1125 = vpack.c.bf16 %v1085, %v1084
    %v1126 = vpack.c.bf16 %v1087, %v1086
    %v1127 = vpack.c.bf16 %v1089, %v1088
    %v1128 = vpack.c.bf16 %v1091, %v1090
    %v1129 = vpack.c.bf16 %v1093, %v1092
    %v1130 = vpack.c.bf16 %v1095, %v1094
    %v1131 = vpack.c.bf16 %v1097, %v1096
    %v1132 = vpack.c.bf16 %v1099, %v1098
    %v1133 = vpack.c.bf16 %v1101, %v1100
    %1134 = vmatprep.subr.bf16.mxu0 0
    %1135 = vmatpush1.bf16.msra.mxu0 %v1102
    %1136 = vmatprep.subr.bf16.mxu0 0
    %1137 = vmatpush1.bf16.msra.mxu0 %v1103
    %1138 = vmatprep.subr.bf16.mxu0 0
    %1139 = vmatpush1.bf16.msra.mxu0 %v1104
    %1140 = vmatprep.subr.bf16.mxu0 0
    %1141 = vmatpush1.bf16.msra.mxu0 %v1105
    %1142 = vmatprep.subr.bf16.mxu0 0
    %1143 = vmatpush1.bf16.msra.mxu0 %v1106
    %1144 = vmatprep.subr.bf16.mxu0 0
    %1145 = vmatpush1.bf16.msra.mxu0 %v1107
    %1146 = vmatprep.subr.bf16.mxu0 0
    %1147 = vmatpush1.bf16.msra.mxu0 %v1108
    %1148 = vmatprep.subr.bf16.mxu0 0
    %1149 = vmatpush1.bf16.msra.mxu0 %v1109
    %1150 = vmatprep.subr.bf16.mxu0 0
    %1151 = vmatpush1.bf16.msra.mxu0 0
    %1152 = vmatprep.subr.bf16.mxu0 0
    %1153 = vmatpush1.bf16.msra.mxu0 0
    %1154 = vmatprep.subr.bf16.mxu0 0
    %1155 = vmatpush1.bf16.msra.mxu0 0
    %1156 = vmatprep.subr.bf16.mxu0 0
    %1157 = vmatpush1.bf16.msra.mxu0 0
    %1158 = vmatprep.subr.bf16.mxu0 0
    %1159 = vmatpush1.bf16.msra.mxu0 0
    %1160 = vmatprep.subr.bf16.mxu0 0
    %1161 = vmatpush1.bf16.msra.mxu0 0
    %1162 = vmatprep.subr.bf16.mxu0 0
    %1163 = vmatpush1.bf16.msra.mxu0 0
    %1164 = vmatprep.subr.bf16.mxu0 0
    %1165 = vmatpush1.bf16.msra.mxu0 0
    %1166 = vmatprep.mubr.bf16.mxu0 0
    %1167 = vmatmul.mubr.bf16.gmra.mrb[0].mxu0 %v1006
    %v1168 = vpop.f32.mrb[0].mxu0
    %v1169 = vadd.f32 0.0, %v1168
    %v1170 = vpop.f32.mrb[0].mxu0
    %v1171 = vpop.f32.mrb[0].mxu0
    %v1172 = vadd.f32 0.0, %v1171
    %v1173 = vpop.f32.mrb[0].mxu0
    %1174 = vmatprep.mubr.bf16.mxu0 0
    %1175 = vmatmul.mubr.bf16.gmra.mrb[0].mxu0 %v1007
    %v1176 = vpop.f32.mrb[0].mxu0
    %v1177 = vadd.f32 0.0, %v1176
    %v1178 = vpop.f32.mrb[0].mxu0
    %v1179 = vpop.f32.mrb[0].mxu0
    %v1180 = vadd.f32 0.0, %v1179
    %v1181 = vpop.f32.mrb[0].mxu0
    %1182 = vmatprep.mubr.bf16.mxu0 0
    %1183 = vmatmul.mubr.bf16.gmra.mrb[0].mxu0 %v1008
    %v1184 = vpop.f32.mrb[0].mxu0
    %v1185 = vadd.f32 0.0, %v1184
    %v1186 = vpop.f32.mrb[0].mxu0
    %v1187 = vpop.f32.mrb[0].mxu0
    %v1188 = vadd.f32 0.0, %v1187
    %v1189 = vpop.f32.mrb[0].mxu0
    %1190 = vmatprep.mubr.bf16.mxu0 0
    %1191 = vmatmul.mubr.bf16.gmra.mrb[0].mxu0 %v1009
    %v1192 = vpop.f32.mrb[0].mxu0
    %v1193 = vadd.f32 0.0, %v1192
    %v1194 = vpop.f32.mrb[0].mxu0
    %v1195 = vpop.f32.mrb[0].mxu0
    %v1196 = vadd.f32 0.0, %v1195
    %v1197 = vpop.f32.mrb[0].mxu0
    %1198 = vmatprep.mubr.bf16.mxu0 0
    %1199 = vmatmul.mubr.bf16.gmra.mrb[0].mxu0 %v1010
    %v1200 = vpop.f32.mrb[0].mxu0
    %v1201 = vadd.f32 0.0, %v1200
    %v1202 = vpop.f32.mrb[0].mxu0
    %v1203 = vpop.f32.mrb[0].mxu0
    %v1204 = vadd.f32 0.0, %v1203
    %v1205 = vpop.f32.mrb[0].mxu0
    %1206 = vmatprep.mubr.bf16.mxu0 0
    %1207 = vmatmul.mubr.bf16.gmra.mrb[0].mxu0 %v1011
    %v1208 = vpop.f32.mrb[0].mxu0
    %v1209 = vadd.f32 0.0, %v1208
    %v1210 = vpop.f32.mrb[0].mxu0
    %v1211 = vpop.f32.mrb[0].mxu0
    %v1212 = vadd.f32 0.0, %v1211
    %v1213 = vpop.f32.mrb[0].mxu0
    %1214 = vmatprep.mubr.bf16.mxu0 0
    %1215 = vmatmul.mubr.bf16.gmra.mrb[0].mxu0 %v1012
    %v1216 = vpop.f32.mrb[0].mxu0
    %v1217 = vadd.f32 0.0, %v1216
    %v1218 = vpop.f32.mrb[0].mxu0
    %v1219 = vpop.f32.mrb[0].mxu0
    %v1220 = vadd.f32 0.0, %v1219
    %v1221 = vpop.f32.mrb[0].mxu0
    %1222 = vmatprep.mubr.bf16.mxu0 0
    %1223 = vmatmul.mubr.bf16.gmra.mrb[0].mxu0 %v1013
    %v1224 = vpop.f32.mrb[0].mxu0
    %v1225 = vadd.f32 0.0, %v1224
    %v1226 = vpop.f32.mrb[0].mxu0
    %v1227 = vpop.f32.mrb[0].mxu0
    %v1228 = vadd.f32 0.0, %v1227
    %v1229 = vpop.f32.mrb[0].mxu0
    %1230 = vdwg.mxu0
    %v1231 = vmul.f32 %v1169, 1.1111112
    %v1232 = vmul.f32 %v1172, 1.1111112
    %v1233 = vmul.f32 %v1177, 1.1111112
    %v1234 = vmul.f32 %v1180, 1.1111112
    %v1235 = vmul.f32 %v1185, 1.1111112
    %v1236 = vmul.f32 %v1188, 1.1111112
    %v1237 = vmul.f32 %v1193, 1.1111112
    %v1238 = vmul.f32 %v1196, 1.1111112
    %v1239 = vmul.f32 %v1201, 1.1111112
    %v1240 = vmul.f32 %v1204, 1.1111112
    %v1241 = vmul.f32 %v1209, 1.1111112
    %v1242 = vmul.f32 %v1212, 1.1111112
    %v1243 = vmul.f32 %v1217, 1.1111112
    %v1244 = vmul.f32 %v1220, 1.1111112
    %v1245 = vmul.f32 %v1225, 1.1111112
    %v1246 = vmul.f32 %v1228, 1.1111112
    %1247 = vmatprep.subr.bf16.mxu0 0
    %1248 = vmatpush1.bf16.msra.mxu0 %v1110
    %1249 = vmatprep.subr.bf16.mxu0 0
    %1250 = vmatpush1.bf16.msra.mxu0 %v1111
    %1251 = vmatprep.subr.bf16.mxu0 0
    %1252 = vmatpush1.bf16.msra.mxu0 %v1112
    %1253 = vmatprep.subr.bf16.mxu0 0
    %1254 = vmatpush1.bf16.msra.mxu0 %v1113
    %1255 = vmatprep.subr.bf16.mxu0 0
    %1256 = vmatpush1.bf16.msra.mxu0 %v1114
    %1257 = vmatprep.subr.bf16.mxu0 0
    %1258 = vmatpush1.bf16.msra.mxu0 %v1115
    %1259 = vmatprep.subr.bf16.mxu0 0
    %1260 = vmatpush1.bf16.msra.mxu0 %v1116
    %1261 = vmatprep.subr.bf16.mxu0 0
    %1262 = vmatpush1.bf16.msra.mxu0 %v1117
    %1263 = vmatprep.subr.bf16.mxu0 0
    %1264 = vmatpush1.bf16.msra.mxu0 0
    %1265 = vmatprep.subr.bf16.mxu0 0
    %1266 = vmatpush1.bf16.msra.mxu0 0
    %1267 = vmatprep.subr.bf16.mxu0 0
    %1268 = vmatpush1.bf16.msra.mxu0 0
    %1269 = vmatprep.subr.bf16.mxu0 0
    %1270 = vmatpush1.bf16.msra.mxu0 0
    %1271 = vmatprep.subr.bf16.mxu0 0
    %1272 = vmatpush1.bf16.msra.mxu0 0
    %1273 = vmatprep.subr.bf16.mxu0 0
    %1274 = vmatpush1.bf16.msra.mxu0 0
    %1275 = vmatprep.subr.bf16.mxu0 0
    %1276 = vmatpush1.bf16.msra.mxu0 0
    %1277 = vmatprep.subr.bf16.mxu0 0
    %1278 = vmatpush1.bf16.msra.mxu0 0
    %1279 = vmatprep.mubr.bf16.mxu0 0
    %1280 = vmatmul.mubr.bf16.gmra.mrb[0].mxu0 %v1014
    %v1281 = vpop.f32.mrb[0].mxu0
    %v1282 = vadd.f32 0.0, %v1281
    %v1283 = vpop.f32.mrb[0].mxu0
    %v1284 = vpop.f32.mrb[0].mxu0
    %v1285 = vadd.f32 0.0, %v1284
    %v1286 = vpop.f32.mrb[0].mxu0
    %1287 = vmatprep.mubr.bf16.mxu0 0
    %1288 = vmatmul.mubr.bf16.gmra.mrb[0].mxu0 %v1015
    %v1289 = vpop.f32.mrb[0].mxu0
    %v1290 = vadd.f32 0.0, %v1289
    %v1291 = vpop.f32.mrb[0].mxu0
    %v1292 = vpop.f32.mrb[0].mxu0
    %v1293 = vadd.f32 0.0, %v1292
    %v1294 = vpop.f32.mrb[0].mxu0
    %1295 = vmatprep.mubr.bf16.mxu0 0
    %1296 = vmatmul.mubr.bf16.gmra.mrb[0].mxu0 %v1016
    %v1297 = vpop.f32.mrb[0].mxu0
    %v1298 = vadd.f32 0.0, %v1297
    %v1299 = vpop.f32.mrb[0].mxu0
    %v1300 = vpop.f32.mrb[0].mxu0
    %v1301 = vadd.f32 0.0, %v1300
    %v1302 = vpop.f32.mrb[0].mxu0
    %1303 = vmatprep.mubr.bf16.mxu0 0
    %1304 = vmatmul.mubr.bf16.gmra.mrb[0].mxu0 %v1017
    %v1305 = vpop.f32.mrb[0].mxu0
    %v1306 = vadd.f32 0.0, %v1305
    %v1307 = vpop.f32.mrb[0].mxu0
    %v1308 = vpop.f32.mrb[0].mxu0
    %v1309 = vadd.f32 0.0, %v1308
    %v1310 = vpop.f32.mrb[0].mxu0
    %1311 = vmatprep.mubr.bf16.mxu0 0
    %1312 = vmatmul.mubr.bf16.gmra.mrb[0].mxu0 %v1018
    %v1313 = vpop.f32.mrb[0].mxu0
    %v1314 = vadd.f32 0.0, %v1313
    %v1315 = vpop.f32.mrb[0].mxu0
    %v1316 = vpop.f32.mrb[0].mxu0
    %v1317 = vadd.f32 0.0, %v1316
    %v1318 = vpop.f32.mrb[0].mxu0
    %1319 = vmatprep.mubr.bf16.mxu0 0
    %1320 = vmatmul.mubr.bf16.gmra.mrb[0].mxu0 %v1019
    %v1321 = vpop.f32.mrb[0].mxu0
    %v1322 = vadd.f32 0.0, %v1321
    %v1323 = vpop.f32.mrb[0].mxu0
    %v1324 = vpop.f32.mrb[0].mxu0
    %v1325 = vadd.f32 0.0, %v1324
    %v1326 = vpop.f32.mrb[0].mxu0
    %1327 = vmatprep.mubr.bf16.mxu0 0
    %1328 = vmatmul.mubr.bf16.gmra.mrb[0].mxu0 %v1020
    %v1329 = vpop.f32.mrb[0].mxu0
    %v1330 = vadd.f32 0.0, %v1329
    %v1331 = vpop.f32.mrb[0].mxu0
    %v1332 = vpop.f32.mrb[0].mxu0
    %v1333 = vadd.f32 0.0, %v1332
    %v1334 = vpop.f32.mrb[0].mxu0
    %1335 = vmatprep.mubr.bf16.mxu0 0
    %1336 = vmatmul.mubr.bf16.gmra.mrb[0].mxu0 %v1021
    %v1337 = vpop.f32.mrb[0].mxu0
    %v1338 = vadd.f32 0.0, %v1337
    %v1339 = vpop.f32.mrb[0].mxu0
    %v1340 = vpop.f32.mrb[0].mxu0
    %v1341 = vadd.f32 0.0, %v1340
    %v1342 = vpop.f32.mrb[0].mxu0
    %1343 = vdwg.mxu0
    %v1344 = vmul.f32 %v1282, 1.1111112
    %v1345 = vmul.f32 %v1285, 1.1111112
    %v1346 = vmul.f32 %v1290, 1.1111112
    %v1347 = vmul.f32 %v1293, 1.1111112
    %v1348 = vmul.f32 %v1298, 1.1111112
    %v1349 = vmul.f32 %v1301, 1.1111112
    %v1350 = vmul.f32 %v1306, 1.1111112
    %v1351 = vmul.f32 %v1309, 1.1111112
    %v1352 = vmul.f32 %v1314, 1.1111112
    %v1353 = vmul.f32 %v1317, 1.1111112
    %v1354 = vmul.f32 %v1322, 1.1111112
    %v1355 = vmul.f32 %v1325, 1.1111112
    %v1356 = vmul.f32 %v1330, 1.1111112
    %v1357 = vmul.f32 %v1333, 1.1111112
    %v1358 = vmul.f32 %v1338, 1.1111112
    %v1359 = vmul.f32 %v1341, 1.1111112
    %1360 = vmatprep.subr.bf16.mxu0 0
    %1361 = vmatpush1.bf16.msra.mxu0 %v1118
    %1362 = vmatprep.subr.bf16.mxu0 0
    %1363 = vmatpush1.bf16.msra.mxu0 %v1119
    %1364 = vmatprep.subr.bf16.mxu0 0
    %1365 = vmatpush1.bf16.msra.mxu0 %v1120
    %1366 = vmatprep.subr.bf16.mxu0 0
    %1367 = vmatpush1.bf16.msra.mxu0 %v1121
    %1368 = vmatprep.subr.bf16.mxu0 0
    %1369 = vmatpush1.bf16.msra.mxu0 %v1122
    %1370 = vmatprep.subr.bf16.mxu0 0
    %1371 = vmatpush1.bf16.msra.mxu0 %v1123
    %1372 = vmatprep.subr.bf16.mxu0 0
    %1373 = vmatpush1.bf16.msra.mxu0 %v1124
    %1374 = vmatprep.subr.bf16.mxu0 0
    %1375 = vmatpush1.bf16.msra.mxu0 %v1125
    %1376 = vmatprep.subr.bf16.mxu0 0
    %1377 = vmatpush1.bf16.msra.mxu0 0
    %1378 = vmatprep.subr.bf16.mxu0 0
    %1379 = vmatpush1.bf16.msra.mxu0 0
    %1380 = vmatprep.subr.bf16.mxu0 0
    %1381 = vmatpush1.bf16.msra.mxu0 0
    %1382 = vmatprep.subr.bf16.mxu0 0
    %1383 = vmatpush1.bf16.msra.mxu0 0
    %1384 = vmatprep.subr.bf16.mxu0 0
    %1385 = vmatpush1.bf16.msra.mxu0 0
    %1386 = vmatprep.subr.bf16.mxu0 0
    %1387 = vmatpush1.bf16.msra.mxu0 0
    %1388 = vmatprep.subr.bf16.mxu0 0
    %1389 = vmatpush1.bf16.msra.mxu0 0
    %1390 = vmatprep.subr.bf16.mxu0 0
    %1391 = vmatpush1.bf16.msra.mxu0 0
    %1392 = vmatprep.mubr.bf16.mxu0 0
    %1393 = vmatmul.mubr.bf16.gmra.mrb[0].mxu0 %v1022
    %v1394 = vpop.f32.mrb[0].mxu0
    %v1395 = vadd.f32 0.0, %v1394
    %v1396 = vpop.f32.mrb[0].mxu0
    %v1397 = vpop.f32.mrb[0].mxu0
    %v1398 = vadd.f32 0.0, %v1397
    %v1399 = vpop.f32.mrb[0].mxu0
    %1400 = vmatprep.mubr.bf16.mxu0 0
    %1401 = vmatmul.mubr.bf16.gmra.mrb[0].mxu0 %v1023
    %v1402 = vpop.f32.mrb[0].mxu0
    %v1403 = vadd.f32 0.0, %v1402
    %v1404 = vpop.f32.mrb[0].mxu0
    %v1405 = vpop.f32.mrb[0].mxu0
    %v1406 = vadd.f32 0.0, %v1405
    %v1407 = vpop.f32.mrb[0].mxu0
    %1408 = vmatprep.mubr.bf16.mxu0 0
    %1409 = vmatmul.mubr.bf16.gmra.mrb[0].mxu0 %v1024
    %v1410 = vpop.f32.mrb[0].mxu0
    %v1411 = vadd.f32 0.0, %v1410
    %v1412 = vpop.f32.mrb[0].mxu0
    %v1413 = vpop.f32.mrb[0].mxu0
    %v1414 = vadd.f32 0.0, %v1413
    %v1415 = vpop.f32.mrb[0].mxu0
    %1416 = vmatprep.mubr.bf16.mxu0 0
    %1417 = vmatmul.mubr.bf16.gmra.mrb[0].mxu0 %v1025
    %v1418 = vpop.f32.mrb[0].mxu0
    %v1419 = vadd.f32 0.0, %v1418
    %v1420 = vpop.f32.mrb[0].mxu0
    %v1421 = vpop.f32.mrb[0].mxu0
    %v1422 = vadd.f32 0.0, %v1421
    %v1423 = vpop.f32.mrb[0].mxu0
    %1424 = vmatprep.mubr.bf16.mxu0 0
    %1425 = vmatmul.mubr.bf16.gmra.mrb[0].mxu0 %v1026
    %v1426 = vpop.f32.mrb[0].mxu0
    %v1427 = vadd.f32 0.0, %v1426
    %v1428 = vpop.f32.mrb[0].mxu0
    %v1429 = vpop.f32.mrb[0].mxu0
    %v1430 = vadd.f32 0.0, %v1429
    %v1431 = vpop.f32.mrb[0].mxu0
    %1432 = vmatprep.mubr.bf16.mxu0 0
    %1433 = vmatmul.mubr.bf16.gmra.mrb[0].mxu0 %v1027
    %v1434 = vpop.f32.mrb[0].mxu0
    %v1435 = vadd.f32 0.0, %v1434
    %v1436 = vpop.f32.mrb[0].mxu0
    %v1437 = vpop.f32.mrb[0].mxu0
    %v1438 = vadd.f32 0.0, %v1437
    %v1439 = vpop.f32.mrb[0].mxu0
    %1440 = vmatprep.mubr.bf16.mxu0 0
    %1441 = vmatmul.mubr.bf16.gmra.mrb[0].mxu0 %v1028
    %v1442 = vpop.f32.mrb[0].mxu0
    %v1443 = vadd.f32 0.0, %v1442
    %v1444 = vpop.f32.mrb[0].mxu0
    %v1445 = vpop.f32.mrb[0].mxu0
    %v1446 = vadd.f32 0.0, %v1445
    %v1447 = vpop.f32.mrb[0].mxu0
    %1448 = vmatprep.mubr.bf16.mxu0 0
    %1449 = vmatmul.mubr.bf16.gmra.mrb[0].mxu0 %v1029
    %v1450 = vpop.f32.mrb[0].mxu0
    %v1451 = vadd.f32 0.0, %v1450
    %v1452 = vpop.f32.mrb[0].mxu0
    %v1453 = vpop.f32.mrb[0].mxu0
    %v1454 = vadd.f32 0.0, %v1453
    %v1455 = vpop.f32.mrb[0].mxu0
    %1456 = vdwg.mxu0
    %v1457 = vmul.f32 %v1395, 1.1111112
    %v1458 = vmul.f32 %v1398, 1.1111112
    %v1459 = vmul.f32 %v1403, 1.1111112
    %v1460 = vmul.f32 %v1406, 1.1111112
    %v1461 = vmul.f32 %v1411, 1.1111112
    %v1462 = vmul.f32 %v1414, 1.1111112
    %v1463 = vmul.f32 %v1419, 1.1111112
    %v1464 = vmul.f32 %v1422, 1.1111112
    %v1465 = vmul.f32 %v1427, 1.1111112
    %v1466 = vmul.f32 %v1430, 1.1111112
    %v1467 = vmul.f32 %v1435, 1.1111112
    %v1468 = vmul.f32 %v1438, 1.1111112
    %v1469 = vmul.f32 %v1443, 1.1111112
    %v1470 = vmul.f32 %v1446, 1.1111112
    %v1471 = vmul.f32 %v1451, 1.1111112
    %v1472 = vmul.f32 %v1454, 1.1111112
    %1473 = vmatprep.subr.bf16.mxu0 0
    %1474 = vmatpush1.bf16.msra.mxu0 %v1126
    %1475 = vmatprep.subr.bf16.mxu0 0
    %1476 = vmatpush1.bf16.msra.mxu0 %v1127
    %1477 = vmatprep.subr.bf16.mxu0 0
    %1478 = vmatpush1.bf16.msra.mxu0 %v1128
    %1479 = vmatprep.subr.bf16.mxu0 0
    %1480 = vmatpush1.bf16.msra.mxu0 %v1129
    %1481 = vmatprep.subr.bf16.mxu0 0
    %1482 = vmatpush1.bf16.msra.mxu0 %v1130
    %1483 = vmatprep.subr.bf16.mxu0 0
    %1484 = vmatpush1.bf16.msra.mxu0 %v1131
    %1485 = vmatprep.subr.bf16.mxu0 0
    %1486 = vmatpush1.bf16.msra.mxu0 %v1132
    %1487 = vmatprep.subr.bf16.mxu0 0
    %1488 = vmatpush1.bf16.msra.mxu0 %v1133
    %1489 = vmatprep.subr.bf16.mxu0 0
    %1490 = vmatpush1.bf16.msra.mxu0 0
    %1491 = vmatprep.subr.bf16.mxu0 0
    %1492 = vmatpush1.bf16.msra.mxu0 0
    %1493 = vmatprep.subr.bf16.mxu0 0
    %1494 = vmatpush1.bf16.msra.mxu0 0
    %1495 = vmatprep.subr.bf16.mxu0 0
    %1496 = vmatpush1.bf16.msra.mxu0 0
    %1497 = vmatprep.subr.bf16.mxu0 0
    %1498 = vmatpush1.bf16.msra.mxu0 0
    %1499 = vmatprep.subr.bf16.mxu0 0
    %1500 = vmatpush1.bf16.msra.mxu0 0
    %1501 = vmatprep.subr.bf16.mxu0 0
    %1502 = vmatpush1.bf16.msra.mxu0 0
    %1503 = vmatprep.subr.bf16.mxu0 0
    %1504 = vmatpush1.bf16.msra.mxu0 0
    %1505 = vmatprep.mubr.bf16.mxu0 0
    %1506 = vmatmul.mubr.bf16.gmra.mrb[0].mxu0 %v1030
    %v1507 = vpop.f32.mrb[0].mxu0
    %v1508 = vadd.f32 0.0, %v1507
    %v1509 = vpop.f32.mrb[0].mxu0
    %v1510 = vpop.f32.mrb[0].mxu0
    %v1511 = vadd.f32 0.0, %v1510
    %v1512 = vpop.f32.mrb[0].mxu0
    %1513 = vmatprep.mubr.bf16.mxu0 0
    %1514 = vmatmul.mubr.bf16.gmra.mrb[0].mxu0 %v1031
    %v1515 = vpop.f32.mrb[0].mxu0
    %v1516 = vadd.f32 0.0, %v1515
    %v1517 = vpop.f32.mrb[0].mxu0
    %v1518 = vpop.f32.mrb[0].mxu0
    %v1519 = vadd.f32 0.0, %v1518
    %v1520 = vpop.f32.mrb[0].mxu0
    %1521 = vmatprep.mubr.bf16.mxu0 0
    %1522 = vmatmul.mubr.bf16.gmra.mrb[0].mxu0 %v1032
    %v1523 = vpop.f32.mrb[0].mxu0
    %v1524 = vadd.f32 0.0, %v1523
    %v1525 = vpop.f32.mrb[0].mxu0
    %v1526 = vpop.f32.mrb[0].mxu0
    %v1527 = vadd.f32 0.0, %v1526
    %v1528 = vpop.f32.mrb[0].mxu0
    %1529 = vmatprep.mubr.bf16.mxu0 0
    %1530 = vmatmul.mubr.bf16.gmra.mrb[0].mxu0 %v1033
    %v1531 = vpop.f32.mrb[0].mxu0
    %v1532 = vadd.f32 0.0, %v1531
    %v1533 = vpop.f32.mrb[0].mxu0
    %v1534 = vpop.f32.mrb[0].mxu0
    %v1535 = vadd.f32 0.0, %v1534
    %v1536 = vpop.f32.mrb[0].mxu0
    %1537 = vmatprep.mubr.bf16.mxu0 0
    %1538 = vmatmul.mubr.bf16.gmra.mrb[0].mxu0 %v1034
    %v1539 = vpop.f32.mrb[0].mxu0
    %v1540 = vadd.f32 0.0, %v1539
    %v1541 = vpop.f32.mrb[0].mxu0
    %v1542 = vpop.f32.mrb[0].mxu0
    %v1543 = vadd.f32 0.0, %v1542
    %v1544 = vpop.f32.mrb[0].mxu0
    %1545 = vmatprep.mubr.bf16.mxu0 0
    %1546 = vmatmul.mubr.bf16.gmra.mrb[0].mxu0 %v1035
    %v1547 = vpop.f32.mrb[0].mxu0
    %v1548 = vadd.f32 0.0, %v1547
    %v1549 = vpop.f32.mrb[0].mxu0
    %v1550 = vpop.f32.mrb[0].mxu0
    %v1551 = vadd.f32 0.0, %v1550
    %v1552 = vpop.f32.mrb[0].mxu0
    %1553 = vmatprep.mubr.bf16.mxu0 0
    %1554 = vmatmul.mubr.bf16.gmra.mrb[0].mxu0 %v1036
    %v1555 = vpop.f32.mrb[0].mxu0
    %v1556 = vadd.f32 0.0, %v1555
    %v1557 = vpop.f32.mrb[0].mxu0
    %v1558 = vpop.f32.mrb[0].mxu0
    %v1559 = vadd.f32 0.0, %v1558
    %v1560 = vpop.f32.mrb[0].mxu0
    %1561 = vmatprep.mubr.bf16.mxu0 0
    %1562 = vmatmul.mubr.bf16.gmra.mrb[0].mxu0 %v1037
    %v1563 = vpop.f32.mrb[0].mxu0
    %v1564 = vadd.f32 0.0, %v1563
    %v1565 = vpop.f32.mrb[0].mxu0
    %v1566 = vpop.f32.mrb[0].mxu0
    %v1567 = vadd.f32 0.0, %v1566
    %v1568 = vpop.f32.mrb[0].mxu0
    %1569 = vdwg.mxu0
    %v1570 = vmul.f32 %v1508, 1.1111112
    %v1571 = vmul.f32 %v1511, 1.1111112
    %v1572 = vmul.f32 %v1516, 1.1111112
    %v1573 = vmul.f32 %v1519, 1.1111112
    %v1574 = vmul.f32 %v1524, 1.1111112
    %v1575 = vmul.f32 %v1527, 1.1111112
    %v1576 = vmul.f32 %v1532, 1.1111112
    %v1577 = vmul.f32 %v1535, 1.1111112
    %v1578 = vmul.f32 %v1540, 1.1111112
    %v1579 = vmul.f32 %v1543, 1.1111112
    %v1580 = vmul.f32 %v1548, 1.1111112
    %v1581 = vmul.f32 %v1551, 1.1111112
    %v1582 = vmul.f32 %v1556, 1.1111112
    %v1583 = vmul.f32 %v1559, 1.1111112
    %v1584 = vmul.f32 %v1564, 1.1111112
    %v1585 = vmul.f32 %v1567, 1.1111112
    %1602 = vrot.lane.b32.xlu0 %v1344, 64
    %v1603 = vpop.permute.xlu0 %1602
    %1604 = vrot.lane.b32.xlu0 %v1345, 64
    %v1605 = vpop.permute.xlu0 %1604
    %1606 = vrot.lane.b32.xlu0 %v1346, 64
    %v1607 = vpop.permute.xlu0 %1606
    %1608 = vrot.lane.b32.xlu0 %v1347, 64
    %v1609 = vpop.permute.xlu0 %1608
    %1610 = vrot.lane.b32.xlu0 %v1348, 64
    %v1611 = vpop.permute.xlu0 %1610
    %1612 = vrot.lane.b32.xlu0 %v1349, 64
    %v1613 = vpop.permute.xlu0 %1612
    %1614 = vrot.lane.b32.xlu0 %v1350, 64
    %v1615 = vpop.permute.xlu0 %1614
    %1616 = vrot.lane.b32.xlu0 %v1351, 64
    %v1617 = vpop.permute.xlu0 %1616
    %1618 = vrot.lane.b32.xlu0 %v1352, 64
    %v1619 = vpop.permute.xlu0 %1618
    %1620 = vrot.lane.b32.xlu0 %v1353, 64
    %v1621 = vpop.permute.xlu0 %1620
    %1622 = vrot.lane.b32.xlu0 %v1354, 64
    %v1623 = vpop.permute.xlu0 %1622
    %1624 = vrot.lane.b32.xlu0 %v1355, 64
    %v1625 = vpop.permute.xlu0 %1624
    %1626 = vrot.lane.b32.xlu0 %v1356, 64
    %v1627 = vpop.permute.xlu0 %1626
    %1628 = vrot.lane.b32.xlu0 %v1357, 64
    %v1629 = vpop.permute.xlu0 %1628
    %1630 = vrot.lane.b32.xlu0 %v1358, 64
    %v1631 = vpop.permute.xlu0 %1630
    %1632 = vrot.lane.b32.xlu0 %v1359, 64
    %v1633 = vpop.permute.xlu0 %1632
    %1666 = vrot.lane.b32.xlu0 %v1570, 64
    %v1667 = vpop.permute.xlu0 %1666
    %1668 = vrot.lane.b32.xlu0 %v1571, 64
    %v1669 = vpop.permute.xlu0 %1668
    %1670 = vrot.lane.b32.xlu0 %v1572, 64
    %v1671 = vpop.permute.xlu0 %1670
    %1672 = vrot.lane.b32.xlu0 %v1573, 64
    %v1673 = vpop.permute.xlu0 %1672
    %1674 = vrot.lane.b32.xlu0 %v1574, 64
    %v1675 = vpop.permute.xlu0 %1674
    %1676 = vrot.lane.b32.xlu0 %v1575, 64
    %v1677 = vpop.permute.xlu0 %1676
    %1678 = vrot.lane.b32.xlu0 %v1576, 64
    %v1679 = vpop.permute.xlu0 %1678
    %1680 = vrot.lane.b32.xlu0 %v1577, 64
    %v1681 = vpop.permute.xlu0 %1680
    %1682 = vrot.lane.b32.xlu0 %v1578, 64
    %v1683 = vpop.permute.xlu0 %1682
    %1684 = vrot.lane.b32.xlu0 %v1579, 64
    %v1685 = vpop.permute.xlu0 %1684
    %1686 = vrot.lane.b32.xlu0 %v1580, 64
    %v1687 = vpop.permute.xlu0 %1686
    %1688 = vrot.lane.b32.xlu0 %v1581, 64
    %v1689 = vpop.permute.xlu0 %1688
    %1690 = vrot.lane.b32.xlu0 %v1582, 64
    %v1691 = vpop.permute.xlu0 %1690
    %1692 = vrot.lane.b32.xlu0 %v1583, 64
    %v1693 = vpop.permute.xlu0 %1692
    %1694 = vrot.lane.b32.xlu0 %v1584, 64
    %v1695 = vpop.permute.xlu0 %1694
    %1696 = vrot.lane.b32.xlu0 %v1585, 64
    %v1697 = vpop.permute.xlu0 %1696
    %vm1714 = vcmask 523264
    %v1715 = vsel %vm1714, %v1231, %v1603
    %v1716 = vsel %vm1714, %v1232, %v1605
    %v1717 = vsel %vm1714, %v1233, %v1607
    %v1718 = vsel %vm1714, %v1234, %v1609
    %v1719 = vsel %vm1714, %v1235, %v1611
    %v1720 = vsel %vm1714, %v1236, %v1613
    %v1721 = vsel %vm1714, %v1237, %v1615
    %v1722 = vsel %vm1714, %v1238, %v1617
    %v1723 = vsel %vm1714, %v1239, %v1619
    %v1724 = vsel %vm1714, %v1240, %v1621
    %v1725 = vsel %vm1714, %v1241, %v1623
    %v1726 = vsel %vm1714, %v1242, %v1625
    %v1727 = vsel %vm1714, %v1243, %v1627
    %v1728 = vsel %vm1714, %v1244, %v1629
    %v1729 = vsel %vm1714, %v1245, %v1631
    %v1730 = vsel %vm1714, %v1246, %v1633
    %v1731 = vsel %vm1714, %v1457, %v1667
    %v1732 = vsel %vm1714, %v1458, %v1669
    %v1733 = vsel %vm1714, %v1459, %v1671
    %v1734 = vsel %vm1714, %v1460, %v1673
    %v1735 = vsel %vm1714, %v1461, %v1675
    %v1736 = vsel %vm1714, %v1462, %v1677
    %v1737 = vsel %vm1714, %v1463, %v1679
    %v1738 = vsel %vm1714, %v1464, %v1681
    %v1739 = vsel %vm1714, %v1465, %v1683
    %v1740 = vsel %vm1714, %v1466, %v1685
    %v1741 = vsel %vm1714, %v1467, %v1687
    %v1742 = vsel %vm1714, %v1468, %v1689
    %v1743 = vsel %vm1714, %v1469, %v1691
    %v1744 = vsel %vm1714, %v1470, %v1693
    %v1745 = vsel %vm1714, %v1471, %v1695
    %v1746 = vsel %vm1714, %v1472, %v1697
    %1747 = vst [vmem:[#allocation4] sm:$0xff] %v1715
    %1748 = vst [vmem:[#allocation4 + $0x8] sm:$0xff] %v1731
    %1749 = vst [vmem:[#allocation4 + $0x10] sm:$0xff] %v1716
    %1750 = vst [vmem:[#allocation4 + $0x18] sm:$0xff] %v1732
    %1751 = vst [vmem:[#allocation4 + $0x20] sm:$0xff] %v1717
    %1752 = vst [vmem:[#allocation4 + $0x28] sm:$0xff] %v1733
    %1753 = vst [vmem:[#allocation4 + $0x30] sm:$0xff] %v1718
    %1754 = vst [vmem:[#allocation4 + $0x38] sm:$0xff] %v1734
    %1755 = vst [vmem:[#allocation4 + $0x40] sm:$0xff] %v1719
    %1756 = vst [vmem:[#allocation4 + $0x48] sm:$0xff] %v1735
    %1757 = vst [vmem:[#allocation4 + $0x50] sm:$0xff] %v1720
    %1758 = vst [vmem:[#allocation4 + $0x58] sm:$0xff] %v1736
    %1759 = vst [vmem:[#allocation4 + $0x60] sm:$0xff] %v1721
    %1760 = vst [vmem:[#allocation4 + $0x68] sm:$0xff] %v1737
    %1761 = vst [vmem:[#allocation4 + $0x70] sm:$0xff] %v1722
    %1762 = vst [vmem:[#allocation4 + $0x78] sm:$0xff] %v1738
    %1763 = vst [vmem:[#allocation4 + $0x80] sm:$0xff] %v1723
    %1764 = vst [vmem:[#allocation4 + $0x88] sm:$0xff] %v1739
    %1765 = vst [vmem:[#allocation4 + $0x90] sm:$0xff] %v1724
    %1766 = vst [vmem:[#allocation4 + $0x98] sm:$0xff] %v1740
    %1767 = vst [vmem:[#allocation4 + $0xa0] sm:$0xff] %v1725
    %1768 = vst [vmem:[#allocation4 + $0xa8] sm:$0xff] %v1741
    %1769 = vst [vmem:[#allocation4 + $0xb0] sm:$0xff] %v1726
    %1770 = vst [vmem:[#allocation4 + $0xb8] sm:$0xff] %v1742
    %1771 = vst [vmem:[#allocation4 + $0xc0] sm:$0xff] %v1727
    %1772 = vst [vmem:[#allocation4 + $0xc8] sm:$0xff] %v1743
    %1773 = vst [vmem:[#allocation4 + $0xd0] sm:$0xff] %v1728
    %1774 = vst [vmem:[#allocation4 + $0xd8] sm:$0xff] %v1744
    %1775 = vst [vmem:[#allocation4 + $0xe0] sm:$0xff] %v1729
    %1776 = vst [vmem:[#allocation4 + $0xe8] sm:$0xff] %v1745
    %1777 = vst [vmem:[#allocation4 + $0xf0] sm:$0xff] %v1730
    %1778 = vst [vmem:[#allocation4 + $0xf8] sm:$0xff] %v1746
    // Predicated region
    $region10: #{tpu_custom_call.1} parent=1 // pred_check
      _
    $region11: #{tpu_custom_call.1} parent=1 // pred_check_branch
      %1780 = sbr.rel (0) target = $region13
    $region12: #{tpu_custom_call.1} parent=1 // pred_region
      %s1782 = ssub.s32 4096, 4096
      %1783 = vsyncadd [#allocation5], %s1782
      %s1784 = sshll.u32 [#allocation4], 4
      %s1785 = int_to_ptr.vmem [resolvable:$true] %s1784
      %1790 = dma.vmem_to_hbm [thread:$0]  %s1785, 4096, %s3, [#allocation5], 256, 256, 16
    $region13: #{tpu_custom_call.1} parent=1 // pred_fallthru
      _
    // Predicated region
    $region14: #{tpu_custom_call.1} parent=1 // pred_check
      _
    $region15: #{tpu_custom_call.1} parent=1 // pred_check_branch
      %1792 = sbr.rel (0) target = $region17
    $region16: #{tpu_custom_call.1} parent=1 // pred_region
      %1793 = dma.done [#allocation5], 4096
    $region17: #{tpu_custom_call.1} parent=1 // pred_fallthru
      _
    %1794 = vsyncpa [#allocation5], 1

</llo_original>
